<compile_context>
chip_gen: v6e
topology: v6e:2x2x1
jax: 0.10.0
libtpu: 0.0.40
codegen_flags: <defaults>
</compile_context>

<pallas_src>
import functools

import jax
import jax.numpy as jnp
from jax.experimental import pallas as pl
from jax.experimental.pallas import tpu as pltpu


def _conv_stats_kernel(x_ref, w_ref, y_ref, sum_ref, ssq_ref, patch_ref, *,
                       kh, kw, cin, th, ow, wp, dilation, ns):
    """One (batch, row-strip) step: flat im2col + one MXU matmul + stats.

    x_ref    : (Cin, Lflat)        bf16, full padded image (H,W flattened)
    w_ref    : (Cout_p8, K)        bf16, K = KH*KW*Cin, channel-major taps
    y_ref    : (Cout_p8, TH*OW)    f32, compact conv output for this strip
    sum_ref  : (Cout_p8, 1)        f32, per-(b,s) partial channel sum
    ssq_ref  : (Cout_p8, 1)        f32, per-(b,s) partial channel sum-of-sq
    patch_ref: (K, TH*Wp)          bf16 VMEM scratch ("wide" im2col patch)
    """
    m = th * wp
    # Strip start offset along the flat spatial axis (static when ns == 1).
    base0 = 0 if ns == 1 else pl.program_id(1) * m

    # Lane-dense im2col: every tap is a single contiguous lane slice of the
    # flat image; every patch write covers all TH*Wp lanes.
    for i in range(kh):
        for j in range(kw):
            k0 = (i * kw + j) * cin
            start = base0 + (i * dilation) * wp + j * dilation
            patch_ref[k0:k0 + cin, :] = x_ref[:, pl.ds(start, m)]

    # One MXU matmul per strip: (Cout_p8, K) @ (K, TH*Wp) -> f32.
    acc = jnp.dot(w_ref[...], patch_ref[...],
                  preferred_element_type=jnp.float32)

    # Compact the "wide" rows (Wp columns, last Wp-OW are garbage) to OW
    # columns while storing.  This is the single relayout of the kernel.
    if wp == ow:
        y_ref[...] = acc
    else:
        for r in range(th):
            y_ref[:, r * ow:(r + 1) * ow] = acc[:, r * wp:r * wp + ow]

    # Partial batch-norm statistics from the compacted values (valid columns
    # only, so no masking needed).  Written per (b, s) block -> no grid-axis
    # accumulation -> both grid axes stay "parallel".
    c = y_ref[...]
    sum_ref[...] = jnp.sum(c, axis=1, keepdims=True)
    ssq_ref[...] = jnp.sum(c * c, axis=1, keepdims=True)


def _bn_relu_kernel(y_ref, scale_ref, bias_ref, o_ref):
    """o = relu(y * scale + bias); per-channel (sublane) affine, lane-dense."""
    o_ref[...] = jnp.maximum(y_ref[...] * scale_ref[...] + bias_ref[...], 0.0)


def _pick_strip_rows(oh, ow, wp, k_total, max_patch_bytes=4 << 20):
    """Output-row strip height TH (ns = OH // TH strips per image).

    Prefer a single strip (block == full dim, no alignment constraint, fewest
    grid steps).  Large maps are split so the (K, TH*Wp) bf16 patch stays in
    budget; multi-strip TH must keep TH*OW a multiple of 128 so the compact
    output blocks stay lane-dense.  If no such TH exists we fall back to one
    full strip (always legal, possibly VMEM-heavy).
    """
    if k_total * oh * wp * 2 <= max_patch_bytes:
        return oh
    best = None
    for th in range(1, oh):
        if oh % th or (th * ow) % 128 or k_total * th * wp * 2 > max_patch_bytes:
            continue
        best = th
    # TODO(synk): pad OH so odd feature maps (e.g. 35x35) can still be split.
    return best if best is not None else oh


def _pick_lane_tile(l_total, cp8, max_bytes=8 << 20):
    """Largest 128-multiple divisor of l_total within the byte budget, else full."""
    if l_total * cp8 * 4 <= max_bytes:
        return l_total
    best = None
    for lt in range(128, l_total + 1, 128):
        if l_total % lt == 0 and lt * cp8 * 4 <= max_bytes:
            best = lt
    return best if best is not None else l_total


def _vmem_limit(est_bytes):
    """Right-sized VMEM limit: compiler default unless the footprint needs more.

    Never claims more than 40 MiB so v7x's 64 MiB physical VMEM keeps headroom.
    # TODO(synk): query pltpu.get_tpu_info() for a per-generation ceiling.
    """
    if int(est_bytes * 1.5) <= 16 * 1024 * 1024:
        return None
    return min(int(est_bytes * 1.5), 40 * 1024 * 1024)


def basic_conv2d(x_nchw, weight_oihw, gamma, beta, *, stride=1, padding=0,
                 dilation=1, eps=1e-5):
    """BasicConv2d forward: conv (no bias) -> BN (batch stats) -> ReLU."""
    # TODO(synk): stride > 1 needs strided flat tap slices; not implemented.
    assert stride == 1, "only stride=1 is supported"

    n, cin, h, w_in = x_nchw.shape
    cout, cin_w, kh, kw = weight_oihw.shape
    assert cin_w == cin
    cp8 = ((cout + 7) // 8) * 8                  # sublane-tile channel padding

    hp = h + 2 * padding
    wp = w_in + 2 * padding
    oh = (hp - dilation * (kh - 1) - 1) // stride + 1
    ow = (wp - dilation * (kw - 1) - 1) // stride + 1

    # Extra zero rows at the bottom so in-kernel flat tap slices never run past
    # the block (max overrun is (KW-1)*dilation flat elements).
    tail = (kw - 1) * dilation
    extra_rows = -(-tail // wp) if tail else 0
    hp2 = hp + extra_rows
    lflat = hp2 * wp

    # Input stays NCHW (channel-major, no transpose): zero-pad borders, cast to
    # bf16 (MXU operand) in one fused XLA pass, flatten H,W onto the lane axis.
    # TODO(synk): fold the border zero-fill into the kernel (masked patch rows)
    # to drop this pre-pass entirely.
    xp = jnp.pad(x_nchw.astype(jnp.bfloat16),
                 ((0, 0), (0, 0), (padding, padding + extra_rows),
                  (padding, padding)))
    xflat = xp.reshape(n, cin, lflat)

    # Weights: OIHW -> (Cout, KH*KW*Cin) with tap-major/channel-minor ordering
    # matching the patch rows; pad Cout to the 8-sublane tile; bf16.
    k_total = kh * kw * cin
    wt = jnp.transpose(weight_oihw, (0, 2, 3, 1)).reshape(cout, k_total)
    wt = jnp.pad(wt, ((0, cp8 - cout), (0, 0))).astype(jnp.bfloat16)

    th = _pick_strip_rows(oh, ow, wp, k_total)
    ns = oh // th

    # ---- Pass 1: conv (flat im2col + one matmul) + per-(b,s) channel stats ----
    est1 = (2 * (cin * lflat * 2                  # x block (double-buffered)
                 + cp8 * k_total * 2              # weights
                 + cp8 * th * ow * 4              # compact y block
                 + 2 * cp8 * 128 * 4)             # stats blocks (lane-padded)
            + k_total * th * wp * 2)              # patch scratch (single)
    conv = pl.pallas_call(
        functools.partial(_conv_stats_kernel, kh=kh, kw=kw, cin=cin, th=th,
                          ow=ow, wp=wp, dilation=dilation, ns=ns),
        out_shape=(jax.ShapeDtypeStruct((n, cp8, oh * ow), jnp.float32),
                   jax.ShapeDtypeStruct((n * ns, cp8, 1), jnp.float32),
                   jax.ShapeDtypeStruct((n * ns, cp8, 1), jnp.float32)),
        grid_spec=pltpu.PrefetchScalarGridSpec(
            num_scalar_prefetch=0,
            grid=(n, ns),
            in_specs=[
                # TODO(synk): for very large maps on v7x (64 MiB VMEM), switch
                # to memory_space=pl.ANY + manual halo-strip DMA double-buffer
                # instead of staging the whole per-batch image; these blocks
                # are also grid-(near)-invariant and could use a single buffer.
                pl.BlockSpec((None, cin, lflat), lambda b, s: (b, 0, 0)),
                pl.BlockSpec((cp8, k_total), lambda b, s: (0, 0)),
            ],
            out_specs=(
                pl.BlockSpec((None, cp8, th * ow), lambda b, s: (b, 0, s)),
                pl.BlockSpec((None, cp8, 1), lambda b, s: (b * ns + s, 0, 0)),
                pl.BlockSpec((None, cp8, 1), lambda b, s: (b * ns + s, 0, 0)),
            ),
            scratch_shapes=[pltpu.VMEM((k_total, th * wp), jnp.bfloat16)],
        ),
        compiler_params=pltpu.CompilerParams(
            dimension_semantics=("parallel", "parallel"),
            vmem_limit_bytes=_vmem_limit(est1)),
    )
    y, psum, pssq = conv(xflat, wt)

    # ---- Fold BatchNorm (training-mode batch stats) into scale / bias (f32) ----
    count = jnp.float32(n * oh * ow)
    tot = jnp.sum(psum, axis=0)                   # (Cout_p8, 1)
    tss = jnp.sum(pssq, axis=0)
    mean = tot / count
    # TODO(synk): E[x^2]-E[x]^2 in f32 can cancel for huge N*OH*OW; use a
    # centered second pass if bit-parity with PyTorch BN stats is required.
    var = jnp.maximum(tss / count - mean * mean, 0.0)   # biased, BN train mode
    g = jnp.pad(gamma.astype(jnp.float32), (0, cp8 - cout),
                constant_values=1.0).reshape(cp8, 1)
    bt = jnp.pad(beta.astype(jnp.float32), (0, cp8 - cout)).reshape(cp8, 1)
    rstd = jax.lax.rsqrt(var + eps)
    scale = g * rstd
    bias = bt - mean * scale

    # ---- Pass 2: BN affine + ReLU, channel-major lane-dense, in place on y ----
    lt = _pick_lane_tile(oh * ow, cp8)
    nlt = (oh * ow) // lt
    est2 = 2 * (2 * cp8 * lt * 4 + 2 * cp8 * 128 * 4)
    bn = pl.pallas_call(
        _bn_relu_kernel,
        out_shape=jax.ShapeDtypeStruct((n, cp8, oh * ow), jnp.float32),
        grid_spec=pltpu.PrefetchScalarGridSpec(
            num_scalar_prefetch=0,
            grid=(n, nlt),
            in_specs=[
                pl.BlockSpec((None, cp8, lt), lambda b, t: (b, 0, t)),
                pl.BlockSpec((cp8, 1), lambda b, t: (0, 0)),
                pl.BlockSpec((cp8, 1), lambda b, t: (0, 0)),
            ],
            out_specs=pl.BlockSpec((None, cp8, lt), lambda b, t: (b, 0, t)),
        ),
        input_output_aliases={0: 0},              # update conv output in place
        compiler_params=pltpu.CompilerParams(
            dimension_semantics=("parallel", "parallel"),
            vmem_limit_bytes=_vmem_limit(est2)),
    )
    y2 = bn(y, scale, bias)

    # Already NCHW: split the flat spatial axis (free) and drop pad channels
    # only when Cout is not a multiple of 8.
    out = y2.reshape(n, cp8, oh, ow)
    if cp8 != cout:
        out = out[:, :cout]
    return out


if __name__ == "__main__":
    key = jax.random.PRNGKey(0)
    k_x, k_w = jax.random.split(key)

    # BasicConv2d(in_planes=4, out_planes=8, kernel_size=3, padding=1)
    N, Cin, H, W = 2, 4, 16, 16
    Cout, K = 8, 3
    stride, padding, dilation = 1, 1, 1

    x = jax.random.normal(k_x, (N, Cin, H, W), jnp.float32)
    weight = jax.random.normal(k_w, (Cout, Cin, K, K), jnp.float32) * 0.1
    gamma = jnp.ones((Cout,), jnp.float32)       # nn.BatchNorm2d default init
    beta = jnp.zeros((Cout,), jnp.float32)

    fwd = jax.jit(functools.partial(basic_conv2d, stride=stride,
                                    padding=padding, dilation=dilation))
    out = jax.block_until_ready(fwd(x, weight, gamma, beta))

    # Reference (plain JAX) on the same bf16-rounded operands, f32 accumulation.
    xr = x.astype(jnp.bfloat16).astype(jnp.float32)
    wr = weight.astype(jnp.bfloat16).astype(jnp.float32)
    y_ref = jax.lax.conv_general_dilated(
        xr, wr, window_strides=(stride, stride),
        padding=((padding, padding), (padding, padding)),
        rhs_dilation=(dilation, dilation),
        dimension_numbers=("NCHW", "OIHW", "NCHW"),
        precision=jax.lax.Precision.HIGHEST)
    mean = y_ref.mean(axis=(0, 2, 3), keepdims=True)
    var = y_ref.var(axis=(0, 2, 3), keepdims=True)          # biased, BN train
    ref = (y_ref - mean) * jax.lax.rsqrt(var + 1e-5)
    ref = ref * gamma.reshape(1, -1, 1, 1) + beta.reshape(1, -1, 1, 1)
    ref = jnp.maximum(ref, 0.0)

    assert out.shape == (N, Cout, H, W), out.shape
    err = float(jnp.max(jnp.abs(out - ref)))
    assert err < 2e-3, err
    print("KERNEL_OK")
</pallas_src>

<mosaic_0001>
module attributes {stable_mosaic.version = 11 : i64} {
  func.func @_conv_stats_kernel(%arg0: i32, %arg1: i32, %arg2: memref<1x4x342xbf16, #tpu.memory_space<vmem>>, %arg3: memref<8x36xbf16, #tpu.memory_space<vmem>>, %arg4: memref<1x8x256xf32, #tpu.memory_space<vmem>>, %arg5: memref<1x8x1xf32, #tpu.memory_space<vmem>>, %arg6: memref<1x8x1xf32, #tpu.memory_space<vmem>>, %arg7: memref<36x288xbf16, #tpu.memory_space<vmem>>) attributes {dimension_semantics = [#tpu.dimension_semantics<parallel>, #tpu.dimension_semantics<parallel>], iteration_bounds = array<i64: 2, 1>, scalar_prefetch = 0 : i64, scratch_operands = 1 : i64, tpu.core_type = #tpu.core_type<tc>, window_params = [{transform_indices = @transform_0, window_bounds = array<i64: 1, 4, 342>}, {pipeline_mode = #tpu.pipeline_mode<synchronous>, transform_indices = @transform_1, window_bounds = array<i64: 8, 36>}, {transform_indices = @transform_2, window_bounds = array<i64: 1, 8, 256>}, {transform_indices = @transform_3, window_bounds = array<i64: 1, 8, 1>}, {transform_indices = @transform_4, window_bounds = array<i64: 1, 8, 1>}]} {
    %c0 = arith.constant 0 : index
    %c0_0 = arith.constant 0 : index
    %c0_1 = arith.constant 0 : index
    %0 = vector.load %arg2[%c0, %c0_0, %c0_1] : memref<1x4x342xbf16, #tpu.memory_space<vmem>>, vector<1x4x288xbf16>
    %1 = vector.shape_cast %0 : vector<1x4x288xbf16> to vector<4x288xbf16>
    %c0_2 = arith.constant 0 : index
    %c0_3 = arith.constant 0 : index
    %2 = vector.load %arg7[%c0_2, %c0_3] : memref<36x288xbf16, #tpu.memory_space<vmem>>, vector<4x288xbf16>
    tpu.vector_store %arg7[%c0_2, %c0_3], %1 {strides = array<i32>} : memref<36x288xbf16, #tpu.memory_space<vmem>>, vector<4x288xbf16>,
    %c0_4 = arith.constant 0 : index
    %c0_5 = arith.constant 0 : index
    %c1 = arith.constant 1 : index
    %3 = vector.load %arg2[%c0_4, %c0_5, %c1] : memref<1x4x342xbf16, #tpu.memory_space<vmem>>, vector<1x4x288xbf16>
    %4 = vector.shape_cast %3 : vector<1x4x288xbf16> to vector<4x288xbf16>
    %c4 = arith.constant 4 : index
    %c0_6 = arith.constant 0 : index
    %5 = vector.load %arg7[%c4, %c0_6] : memref<36x288xbf16, #tpu.memory_space<vmem>>, vector<4x288xbf16>
    tpu.vector_store %arg7[%c4, %c0_6], %4 {strides = array<i32>} : memref<36x288xbf16, #tpu.memory_space<vmem>>, vector<4x288xbf16>,
    %c0_7 = arith.constant 0 : index
    %c0_8 = arith.constant 0 : index
    %c2 = arith.constant 2 : index
    %6 = vector.load %arg2[%c0_7, %c0_8, %c2] : memref<1x4x342xbf16, #tpu.memory_space<vmem>>, vector<1x4x288xbf16>
    %7 = vector.shape_cast %6 : vector<1x4x288xbf16> to vector<4x288xbf16>
    %c8 = arith.constant 8 : index
    %c0_9 = arith.constant 0 : index
    %8 = vector.load %arg7[%c8, %c0_9] : memref<36x288xbf16, #tpu.memory_space<vmem>>, vector<4x288xbf16>
    tpu.vector_store %arg7[%c8, %c0_9], %7 {strides = array<i32>} : memref<36x288xbf16, #tpu.memory_space<vmem>>, vector<4x288xbf16>,
    %c0_10 = arith.constant 0 : index
    %c0_11 = arith.constant 0 : index
    %c18 = arith.constant 18 : index
    %9 = vector.load %arg2[%c0_10, %c0_11, %c18] : memref<1x4x342xbf16, #tpu.memory_space<vmem>>, vector<1x4x288xbf16>
    %10 = vector.shape_cast %9 : vector<1x4x288xbf16> to vector<4x288xbf16>
    %c12 = arith.constant 12 : index
    %c0_12 = arith.constant 0 : index
    %11 = vector.load %arg7[%c12, %c0_12] : memref<36x288xbf16, #tpu.memory_space<vmem>>, vector<4x288xbf16>
    tpu.vector_store %arg7[%c12, %c0_12], %10 {strides = array<i32>} : memref<36x288xbf16, #tpu.memory_space<vmem>>, vector<4x288xbf16>,
    %c0_13 = arith.constant 0 : index
    %c0_14 = arith.constant 0 : index
    %c19 = arith.constant 19 : index
    %12 = vector.load %arg2[%c0_13, %c0_14, %c19] : memref<1x4x342xbf16, #tpu.memory_space<vmem>>, vector<1x4x288xbf16>
    %13 = vector.shape_cast %12 : vector<1x4x288xbf16> to vector<4x288xbf16>
    %c16 = arith.constant 16 : index
    %c0_15 = arith.constant 0 : index
    %14 = vector.load %arg7[%c16, %c0_15] : memref<36x288xbf16, #tpu.memory_space<vmem>>, vector<4x288xbf16>
    tpu.vector_store %arg7[%c16, %c0_15], %13 {strides = array<i32>} : memref<36x288xbf16, #tpu.memory_space<vmem>>, vector<4x288xbf16>,
    %c0_16 = arith.constant 0 : index
    %c0_17 = arith.constant 0 : index
    %c20 = arith.constant 20 : index
    %15 = vector.load %arg2[%c0_16, %c0_17, %c20] : memref<1x4x342xbf16, #tpu.memory_space<vmem>>, vector<1x4x288xbf16>
    %16 = vector.shape_cast %15 : vector<1x4x288xbf16> to vector<4x288xbf16>
    %c20_18 = arith.constant 20 : index
    %c0_19 = arith.constant 0 : index
    %17 = vector.load %arg7[%c20_18, %c0_19] : memref<36x288xbf16, #tpu.memory_space<vmem>>, vector<4x288xbf16>
    tpu.vector_store %arg7[%c20_18, %c0_19], %16 {strides = array<i32>} : memref<36x288xbf16, #tpu.memory_space<vmem>>, vector<4x288xbf16>,
    %c0_20 = arith.constant 0 : index
    %c0_21 = arith.constant 0 : index
    %c36 = arith.constant 36 : index
    %18 = vector.load %arg2[%c0_20, %c0_21, %c36] : memref<1x4x342xbf16, #tpu.memory_space<vmem>>, vector<1x4x288xbf16>
    %19 = vector.shape_cast %18 : vector<1x4x288xbf16> to vector<4x288xbf16>
    %c24 = arith.constant 24 : index
    %c0_22 = arith.constant 0 : index
    %20 = vector.load %arg7[%c24, %c0_22] : memref<36x288xbf16, #tpu.memory_space<vmem>>, vector<4x288xbf16>
    tpu.vector_store %arg7[%c24, %c0_22], %19 {strides = array<i32>} : memref<36x288xbf16, #tpu.memory_space<vmem>>, vector<4x288xbf16>,
    %c0_23 = arith.constant 0 : index
    %c0_24 = arith.constant 0 : index
    %c37 = arith.constant 37 : index
    %21 = vector.load %arg2[%c0_23, %c0_24, %c37] : memref<1x4x342xbf16, #tpu.memory_space<vmem>>, vector<1x4x288xbf16>
    %22 = vector.shape_cast %21 : vector<1x4x288xbf16> to vector<4x288xbf16>
    %c28 = arith.constant 28 : index
    %c0_25 = arith.constant 0 : index
    %23 = vector.load %arg7[%c28, %c0_25] : memref<36x288xbf16, #tpu.memory_space<vmem>>, vector<4x288xbf16>
    tpu.vector_store %arg7[%c28, %c0_25], %22 {strides = array<i32>} : memref<36x288xbf16, #tpu.memory_space<vmem>>, vector<4x288xbf16>,
    %c0_26 = arith.constant 0 : index
    %c0_27 = arith.constant 0 : index
    %c38 = arith.constant 38 : index
    %24 = vector.load %arg2[%c0_26, %c0_27, %c38] : memref<1x4x342xbf16, #tpu.memory_space<vmem>>, vector<1x4x288xbf16>
    %25 = vector.shape_cast %24 : vector<1x4x288xbf16> to vector<4x288xbf16>
    %c32 = arith.constant 32 : index
    %c0_28 = arith.constant 0 : index
    %26 = vector.load %arg7[%c32, %c0_28] : memref<36x288xbf16, #tpu.memory_space<vmem>>, vector<4x288xbf16>
    tpu.vector_store %arg7[%c32, %c0_28], %25 {strides = array<i32>} : memref<36x288xbf16, #tpu.memory_space<vmem>>, vector<4x288xbf16>,
    %c0_29 = arith.constant 0 : index
    %c0_30 = arith.constant 0 : index
    %27 = vector.load %arg3[%c0_29, %c0_30] : memref<8x36xbf16, #tpu.memory_space<vmem>>, vector<8x36xbf16>
    %c0_31 = arith.constant 0 : index
    %c0_32 = arith.constant 0 : index
    %28 = vector.load %arg7[%c0_31, %c0_32] : memref<36x288xbf16, #tpu.memory_space<vmem>>, vector<36x288xbf16>
    %cst = arith.constant dense<0.000000e+00> : vector<8x288xf32>
    %29 = tpu.matmul %27, %28, %cst {dimension_numbers = #tpu.dot_dimension_numbers<[1], [0], [0], [1], [0, 0, 1, 1], [], []>} : vector<8x36xbf16>, vector<36x288xbf16>, vector<8x288xf32> -> vector<8x288xf32>
    %30 = vector.extract_strided_slice %29 {offsets = [0, 0], sizes = [8, 16], strides = [1, 1]} : vector<8x288xf32> to vector<8x16xf32>
    %c0_33 = arith.constant 0 : index
    %c0_34 = arith.constant 0 : index
    %c0_35 = arith.constant 0 : index
    %31 = vector.load %arg4[%c0_33, %c0_34, %c0_35] : memref<1x8x256xf32, #tpu.memory_space<vmem>>, vector<1x8x16xf32>
    %32 = vector.shape_cast %31 : vector<1x8x16xf32> to vector<8x16xf32>
    %33 = vector.shape_cast %30 : vector<8x16xf32> to vector<1x8x16xf32>
    tpu.vector_store %arg4[%c0_33, %c0_34, %c0_35], %33 {strides = array<i32>} : memref<1x8x256xf32, #tpu.memory_space<vmem>>, vector<1x8x16xf32>,
    %34 = vector.extract_strided_slice %29 {offsets = [0, 18], sizes = [8, 16], strides = [1, 1]} : vector<8x288xf32> to vector<8x16xf32>
    %c0_36 = arith.constant 0 : index
    %c0_37 = arith.constant 0 : index
    %c16_38 = arith.constant 16 : index
    %35 = vector.load %arg4[%c0_36, %c0_37, %c16_38] : memref<1x8x256xf32, #tpu.memory_space<vmem>>, vector<1x8x16xf32>
    %36 = vector.shape_cast %35 : vector<1x8x16xf32> to vector<8x16xf32>
    %37 = vector.shape_cast %34 : vector<8x16xf32> to vector<1x8x16xf32>
    tpu.vector_store %arg4[%c0_36, %c0_37, %c16_38], %37 {strides = array<i32>} : memref<1x8x256xf32, #tpu.memory_space<vmem>>, vector<1x8x16xf32>,
    %38 = vector.extract_strided_slice %29 {offsets = [0, 36], sizes = [8, 16], strides = [1, 1]} : vector<8x288xf32> to vector<8x16xf32>
    %c0_39 = arith.constant 0 : index
    %c0_40 = arith.constant 0 : index
    %c32_41 = arith.constant 32 : index
    %39 = vector.load %arg4[%c0_39, %c0_40, %c32_41] : memref<1x8x256xf32, #tpu.memory_space<vmem>>, vector<1x8x16xf32>
    %40 = vector.shape_cast %39 : vector<1x8x16xf32> to vector<8x16xf32>
    %41 = vector.shape_cast %38 : vector<8x16xf32> to vector<1x8x16xf32>
    tpu.vector_store %arg4[%c0_39, %c0_40, %c32_41], %41 {strides = array<i32>} : memref<1x8x256xf32, #tpu.memory_space<vmem>>, vector<1x8x16xf32>,
    %42 = vector.extract_strided_slice %29 {offsets = [0, 54], sizes = [8, 16], strides = [1, 1]} : vector<8x288xf32> to vector<8x16xf32>
    %c0_42 = arith.constant 0 : index
    %c0_43 = arith.constant 0 : index
    %c48 = arith.constant 48 : index
    %43 = vector.load %arg4[%c0_42, %c0_43, %c48] : memref<1x8x256xf32, #tpu.memory_space<vmem>>, vector<1x8x16xf32>
    %44 = vector.shape_cast %43 : vector<1x8x16xf32> to vector<8x16xf32>
    %45 = vector.shape_cast %42 : vector<8x16xf32> to vector<1x8x16xf32>
    tpu.vector_store %arg4[%c0_42, %c0_43, %c48], %45 {strides = array<i32>} : memref<1x8x256xf32, #tpu.memory_space<vmem>>, vector<1x8x16xf32>,
    %46 = vector.extract_strided_slice %29 {offsets = [0, 72], sizes = [8, 16], strides = [1, 1]} : vector<8x288xf32> to vector<8x16xf32>
    %c0_44 = arith.constant 0 : index
    %c0_45 = arith.constant 0 : index
    %c64 = arith.constant 64 : index
    %47 = vector.load %arg4[%c0_44, %c0_45, %c64] : memref<1x8x256xf32, #tpu.memory_space<vmem>>, vector<1x8x16xf32>
    %48 = vector.shape_cast %47 : vector<1x8x16xf32> to vector<8x16xf32>
    %49 = vector.shape_cast %46 : vector<8x16xf32> to vector<1x8x16xf32>
    tpu.vector_store %arg4[%c0_44, %c0_45, %c64], %49 {strides = array<i32>} : memref<1x8x256xf32, #tpu.memory_space<vmem>>, vector<1x8x16xf32>,
    %50 = vector.extract_strided_slice %29 {offsets = [0, 90], sizes = [8, 16], strides = [1, 1]} : vector<8x288xf32> to vector<8x16xf32>
    %c0_46 = arith.constant 0 : index
    %c0_47 = arith.constant 0 : index
    %c80 = arith.constant 80 : index
    %51 = vector.load %arg4[%c0_46, %c0_47, %c80] : memref<1x8x256xf32, #tpu.memory_space<vmem>>, vector<1x8x16xf32>
    %52 = vector.shape_cast %51 : vector<1x8x16xf32> to vector<8x16xf32>
    %53 = vector.shape_cast %50 : vector<8x16xf32> to vector<1x8x16xf32>
    tpu.vector_store %arg4[%c0_46, %c0_47, %c80], %53 {strides = array<i32>} : memref<1x8x256xf32, #tpu.memory_space<vmem>>, vector<1x8x16xf32>,
    %54 = vector.extract_strided_slice %29 {offsets = [0, 108], sizes = [8, 16], strides = [1, 1]} : vector<8x288xf32> to vector<8x16xf32>
    %c0_48 = arith.constant 0 : index
    %c0_49 = arith.constant 0 : index
    %c96 = arith.constant 96 : index
    %55 = vector.load %arg4[%c0_48, %c0_49, %c96] : memref<1x8x256xf32, #tpu.memory_space<vmem>>, vector<1x8x16xf32>
    %56 = vector.shape_cast %55 : vector<1x8x16xf32> to vector<8x16xf32>
    %57 = vector.shape_cast %54 : vector<8x16xf32> to vector<1x8x16xf32>
    tpu.vector_store %arg4[%c0_48, %c0_49, %c96], %57 {strides = array<i32>} : memref<1x8x256xf32, #tpu.memory_space<vmem>>, vector<1x8x16xf32>,
    %58 = vector.extract_strided_slice %29 {offsets = [0, 126], sizes = [8, 16], strides = [1, 1]} : vector<8x288xf32> to vector<8x16xf32>
    %c0_50 = arith.constant 0 : index
    %c0_51 = arith.constant 0 : index
    %c112 = arith.constant 112 : index
    %59 = vector.load %arg4[%c0_50, %c0_51, %c112] : memref<1x8x256xf32, #tpu.memory_space<vmem>>, vector<1x8x16xf32>
    %60 = vector.shape_cast %59 : vector<1x8x16xf32> to vector<8x16xf32>
    %61 = vector.shape_cast %58 : vector<8x16xf32> to vector<1x8x16xf32>
    tpu.vector_store %arg4[%c0_50, %c0_51, %c112], %61 {strides = array<i32>} : memref<1x8x256xf32, #tpu.memory_space<vmem>>, vector<1x8x16xf32>,
    %62 = vector.extract_strided_slice %29 {offsets = [0, 144], sizes = [8, 16], strides = [1, 1]} : vector<8x288xf32> to vector<8x16xf32>
    %c0_52 = arith.constant 0 : index
    %c0_53 = arith.constant 0 : index
    %c128 = arith.constant 128 : index
    %63 = vector.load %arg4[%c0_52, %c0_53, %c128] : memref<1x8x256xf32, #tpu.memory_space<vmem>>, vector<1x8x16xf32>
    %64 = vector.shape_cast %63 : vector<1x8x16xf32> to vector<8x16xf32>
    %65 = vector.shape_cast %62 : vector<8x16xf32> to vector<1x8x16xf32>
    tpu.vector_store %arg4[%c0_52, %c0_53, %c128], %65 {strides = array<i32>} : memref<1x8x256xf32, #tpu.memory_space<vmem>>, vector<1x8x16xf32>,
    %66 = vector.extract_strided_slice %29 {offsets = [0, 162], sizes = [8, 16], strides = [1, 1]} : vector<8x288xf32> to vector<8x16xf32>
    %c0_54 = arith.constant 0 : index
    %c0_55 = arith.constant 0 : index
    %c144 = arith.constant 144 : index
    %67 = vector.load %arg4[%c0_54, %c0_55, %c144] : memref<1x8x256xf32, #tpu.memory_space<vmem>>, vector<1x8x16xf32>
    %68 = vector.shape_cast %67 : vector<1x8x16xf32> to vector<8x16xf32>
    %69 = vector.shape_cast %66 : vector<8x16xf32> to vector<1x8x16xf32>
    tpu.vector_store %arg4[%c0_54, %c0_55, %c144], %69 {strides = array<i32>} : memref<1x8x256xf32, #tpu.memory_space<vmem>>, vector<1x8x16xf32>,
    %70 = vector.extract_strided_slice %29 {offsets = [0, 180], sizes = [8, 16], strides = [1, 1]} : vector<8x288xf32> to vector<8x16xf32>
    %c0_56 = arith.constant 0 : index
    %c0_57 = arith.constant 0 : index
    %c160 = arith.constant 160 : index
    %71 = vector.load %arg4[%c0_56, %c0_57, %c160] : memref<1x8x256xf32, #tpu.memory_space<vmem>>, vector<1x8x16xf32>
    %72 = vector.shape_cast %71 : vector<1x8x16xf32> to vector<8x16xf32>
    %73 = vector.shape_cast %70 : vector<8x16xf32> to vector<1x8x16xf32>
    tpu.vector_store %arg4[%c0_56, %c0_57, %c160], %73 {strides = array<i32>} : memref<1x8x256xf32, #tpu.memory_space<vmem>>, vector<1x8x16xf32>,
    %74 = vector.extract_strided_slice %29 {offsets = [0, 198], sizes = [8, 16], strides = [1, 1]} : vector<8x288xf32> to vector<8x16xf32>
    %c0_58 = arith.constant 0 : index
    %c0_59 = arith.constant 0 : index
    %c176 = arith.constant 176 : index
    %75 = vector.load %arg4[%c0_58, %c0_59, %c176] : memref<1x8x256xf32, #tpu.memory_space<vmem>>, vector<1x8x16xf32>
    %76 = vector.shape_cast %75 : vector<1x8x16xf32> to vector<8x16xf32>
    %77 = vector.shape_cast %74 : vector<8x16xf32> to vector<1x8x16xf32>
    tpu.vector_store %arg4[%c0_58, %c0_59, %c176], %77 {strides = array<i32>} : memref<1x8x256xf32, #tpu.memory_space<vmem>>, vector<1x8x16xf32>,
    %78 = vector.extract_strided_slice %29 {offsets = [0, 216], sizes = [8, 16], strides = [1, 1]} : vector<8x288xf32> to vector<8x16xf32>
    %c0_60 = arith.constant 0 : index
    %c0_61 = arith.constant 0 : index
    %c192 = arith.constant 192 : index
    %79 = vector.load %arg4[%c0_60, %c0_61, %c192] : memref<1x8x256xf32, #tpu.memory_space<vmem>>, vector<1x8x16xf32>
    %80 = vector.shape_cast %79 : vector<1x8x16xf32> to vector<8x16xf32>
    %81 = vector.shape_cast %78 : vector<8x16xf32> to vector<1x8x16xf32>
    tpu.vector_store %arg4[%c0_60, %c0_61, %c192], %81 {strides = array<i32>} : memref<1x8x256xf32, #tpu.memory_space<vmem>>, vector<1x8x16xf32>,
    %82 = vector.extract_strided_slice %29 {offsets = [0, 234], sizes = [8, 16], strides = [1, 1]} : vector<8x288xf32> to vector<8x16xf32>
    %c0_62 = arith.constant 0 : index
    %c0_63 = arith.constant 0 : index
    %c208 = arith.constant 208 : index
    %83 = vector.load %arg4[%c0_62, %c0_63, %c208] : memref<1x8x256xf32, #tpu.memory_space<vmem>>, vector<1x8x16xf32>
    %84 = vector.shape_cast %83 : vector<1x8x16xf32> to vector<8x16xf32>
    %85 = vector.shape_cast %82 : vector<8x16xf32> to vector<1x8x16xf32>
    tpu.vector_store %arg4[%c0_62, %c0_63, %c208], %85 {strides = array<i32>} : memref<1x8x256xf32, #tpu.memory_space<vmem>>, vector<1x8x16xf32>,
    %86 = vector.extract_strided_slice %29 {offsets = [0, 252], sizes = [8, 16], strides = [1, 1]} : vector<8x288xf32> to vector<8x16xf32>
    %c0_64 = arith.constant 0 : index
    %c0_65 = arith.constant 0 : index
    %c224 = arith.constant 224 : index
    %87 = vector.load %arg4[%c0_64, %c0_65, %c224] : memref<1x8x256xf32, #tpu.memory_space<vmem>>, vector<1x8x16xf32>
    %88 = vector.shape_cast %87 : vector<1x8x16xf32> to vector<8x16xf32>
    %89 = vector.shape_cast %86 : vector<8x16xf32> to vector<1x8x16xf32>
    tpu.vector_store %arg4[%c0_64, %c0_65, %c224], %89 {strides = array<i32>} : memref<1x8x256xf32, #tpu.memory_space<vmem>>, vector<1x8x16xf32>,
    %90 = vector.extract_strided_slice %29 {offsets = [0, 270], sizes = [8, 16], strides = [1, 1]} : vector<8x288xf32> to vector<8x16xf32>
    %c0_66 = arith.constant 0 : index
    %c0_67 = arith.constant 0 : index
    %c240 = arith.constant 240 : index
    %91 = vector.load %arg4[%c0_66, %c0_67, %c240] : memref<1x8x256xf32, #tpu.memory_space<vmem>>, vector<1x8x16xf32>
    %92 = vector.shape_cast %91 : vector<1x8x16xf32> to vector<8x16xf32>
    %93 = vector.shape_cast %90 : vector<8x16xf32> to vector<1x8x16xf32>
    tpu.vector_store %arg4[%c0_66, %c0_67, %c240], %93 {strides = array<i32>} : memref<1x8x256xf32, #tpu.memory_space<vmem>>, vector<1x8x16xf32>,
    %c0_68 = arith.constant 0 : index
    %c0_69 = arith.constant 0 : index
    %c0_70 = arith.constant 0 : index
    %94 = vector.load %arg4[%c0_68, %c0_69, %c0_70] : memref<1x8x256xf32, #tpu.memory_space<vmem>>, vector<1x8x256xf32>
    %95 = vector.shape_cast %94 : vector<1x8x256xf32> to vector<8x256xf32>
    %cst_71 = arith.constant dense<0.000000e+00> : vector<8xf32>
    %96 = vector.multi_reduction <add>, %95, %cst_71 [1] : vector<8x256xf32> to vector<8xf32>
    %97 = vector.shape_cast %96 : vector<8xf32> to vector<8x1xf32>
    %c0_72 = arith.constant 0 : index
    %c0_73 = arith.constant 0 : index
    %c0_74 = arith.constant 0 : index
    %98 = vector.load %arg5[%c0_72, %c0_73, %c0_74] : memref<1x8x1xf32, #tpu.memory_space<vmem>>, vector<1x8x1xf32>
    %99 = vector.shape_cast %98 : vector<1x8x1xf32> to vector<8x1xf32>
    %100 = vector.shape_cast %97 : vector<8x1xf32> to vector<1x8x1xf32>
    tpu.vector_store %arg5[%c0_72, %c0_73, %c0_74], %100 {strides = array<i32>} : memref<1x8x1xf32, #tpu.memory_space<vmem>>, vector<1x8x1xf32>,
    %101 = arith.mulf %95, %95 : vector<8x256xf32>
    %cst_75 = arith.constant dense<0.000000e+00> : vector<8xf32>
    %102 = vector.multi_reduction <add>, %101, %cst_75 [1] : vector<8x256xf32> to vector<8xf32>
    %103 = vector.shape_cast %102 : vector<8xf32> to vector<8x1xf32>
    %c0_76 = arith.constant 0 : index
    %c0_77 = arith.constant 0 : index
    %c0_78 = arith.constant 0 : index
    %104 = vector.load %arg6[%c0_76, %c0_77, %c0_78] : memref<1x8x1xf32, #tpu.memory_space<vmem>>, vector<1x8x1xf32>
    %105 = vector.shape_cast %104 : vector<1x8x1xf32> to vector<8x1xf32>
    %106 = vector.shape_cast %103 : vector<8x1xf32> to vector<1x8x1xf32>
    tpu.vector_store %arg6[%c0_76, %c0_77, %c0_78], %106 {strides = array<i32>} : memref<1x8x1xf32, #tpu.memory_space<vmem>>, vector<1x8x1xf32>,
    return
  }
  func.func @transform_0(%arg0: i32, %arg1: i32) -> (i32, i32, i32) {
    %c0_i32 = arith.constant 0 : i32
    %c0_i32_0 = arith.constant 0 : i32
    %c0_i32_1 = arith.constant 0 : i32
    return %arg0, %c0_i32, %c0_i32_0 : i32, i32, i32
  }
  func.func @transform_1(%arg0: i32, %arg1: i32) -> (i32, i32) {
    %c0_i32 = arith.constant 0 : i32
    %c0_i32_0 = arith.constant 0 : i32
    %c0_i32_1 = arith.constant 0 : i32
    return %c0_i32, %c0_i32_0 : i32, i32
  }
  func.func @transform_2(%arg0: i32, %arg1: i32) -> (i32, i32, i32) {
    %c0_i32 = arith.constant 0 : i32
    %c0_i32_0 = arith.constant 0 : i32
    return %arg0, %c0_i32, %arg1 : i32, i32, i32
  }
  func.func @transform_3(%arg0: i32, %arg1: i32) -> (i32, i32, i32) {
    %c1_i32 = arith.constant 1 : i32
    %0 = arith.muli %arg0, %c1_i32 : i32
    %1 = arith.addi %0, %arg1 : i32
    %c0_i32 = arith.constant 0 : i32
    %c0_i32_0 = arith.constant 0 : i32
    %c0_i32_1 = arith.constant 0 : i32
    return %1, %c0_i32, %c0_i32_0 : i32, i32, i32
  }
  func.func @transform_4(%arg0: i32, %arg1: i32) -> (i32, i32, i32) {
    %c1_i32 = arith.constant 1 : i32
    %0 = arith.muli %arg0, %c1_i32 : i32
    %1 = arith.addi %0, %arg1 : i32
    %c0_i32 = arith.constant 0 : i32
    %c0_i32_0 = arith.constant 0 : i32
    %c0_i32_1 = arith.constant 0 : i32
    return %1, %c0_i32, %c0_i32_0 : i32, i32, i32
  }
}

module attributes {stable_mosaic.version = 11 : i64} {
  func.func @_bn_relu_kernel(%arg0: i32, %arg1: i32, %arg2: memref<1x8x256xf32, #tpu.memory_space<vmem>>, %arg3: memref<8x1xf32, #tpu.memory_space<vmem>>, %arg4: memref<8x1xf32, #tpu.memory_space<vmem>>, %arg5: memref<1x8x256xf32, #tpu.memory_space<vmem>>) attributes {dimension_semantics = [#tpu.dimension_semantics<parallel>, #tpu.dimension_semantics<parallel>], iteration_bounds = array<i64: 2, 1>, scalar_prefetch = 0 : i64, scratch_operands = 0 : i64, tpu.core_type = #tpu.core_type<tc>, window_params = [{transform_indices = @transform_0, window_bounds = array<i64: 1, 8, 256>}, {pipeline_mode = #tpu.pipeline_mode<synchronous>, transform_indices = @transform_1, window_bounds = array<i64: 8, 1>}, {pipeline_mode = #tpu.pipeline_mode<synchronous>, transform_indices = @transform_2, window_bounds = array<i64: 8, 1>}, {transform_indices = @transform_3, window_bounds = array<i64: 1, 8, 256>}]} {
    %c0 = arith.constant 0 : index
    %c0_0 = arith.constant 0 : index
    %c0_1 = arith.constant 0 : index
    %0 = vector.load %arg2[%c0, %c0_0, %c0_1] : memref<1x8x256xf32, #tpu.memory_space<vmem>>, vector<1x8x256xf32>
    %1 = vector.shape_cast %0 : vector<1x8x256xf32> to vector<8x256xf32>
    %c0_2 = arith.constant 0 : index
    %c0_3 = arith.constant 0 : index
    %2 = vector.load %arg3[%c0_2, %c0_3] : memref<8x1xf32, #tpu.memory_space<vmem>>, vector<8x1xf32>
    %3 = vector.broadcast %2 : vector<8x1xf32> to vector<8x256xf32>
    %4 = arith.mulf %1, %3 : vector<8x256xf32>
    %c0_4 = arith.constant 0 : index
    %c0_5 = arith.constant 0 : index
    %5 = vector.load %arg4[%c0_4, %c0_5] : memref<8x1xf32, #tpu.memory_space<vmem>>, vector<8x1xf32>
    %6 = vector.broadcast %5 : vector<8x1xf32> to vector<8x256xf32>
    %7 = arith.addf %4, %6 : vector<8x256xf32>
    %cst = arith.constant 0.000000e+00 : f32
    %8 = vector.broadcast %cst : f32 to vector<8x256xf32>
    %9 = arith.maximumf %7, %8 : vector<8x256xf32>
    %c0_6 = arith.constant 0 : index
    %c0_7 = arith.constant 0 : index
    %c0_8 = arith.constant 0 : index
    %10 = vector.load %arg5[%c0_6, %c0_7, %c0_8] : memref<1x8x256xf32, #tpu.memory_space<vmem>>, vector<1x8x256xf32>
    %11 = vector.shape_cast %10 : vector<1x8x256xf32> to vector<8x256xf32>
    %12 = vector.shape_cast %9 : vector<8x256xf32> to vector<1x8x256xf32>
    tpu.vector_store %arg5[%c0_6, %c0_7, %c0_8], %12 {strides = array<i32>} : memref<1x8x256xf32, #tpu.memory_space<vmem>>, vector<1x8x256xf32>,
    return
  }
  func.func @transform_0(%arg0: i32, %arg1: i32) -> (i32, i32, i32) {
    %c0_i32 = arith.constant 0 : i32
    %c0_i32_0 = arith.constant 0 : i32
    return %arg0, %c0_i32, %arg1 : i32, i32, i32
  }
  func.func @transform_1(%arg0: i32, %arg1: i32) -> (i32, i32) {
    %c0_i32 = arith.constant 0 : i32
    %c0_i32_0 = arith.constant 0 : i32
    %c0_i32_1 = arith.constant 0 : i32
    return %c0_i32, %c0_i32_0 : i32, i32
  }
  func.func @transform_2(%arg0: i32, %arg1: i32) -> (i32, i32) {
    %c0_i32 = arith.constant 0 : i32
    %c0_i32_0 = arith.constant 0 : i32
    %c0_i32_1 = arith.constant 0 : i32
    return %c0_i32, %c0_i32_0 : i32, i32
  }
  func.func @transform_3(%arg0: i32, %arg1: i32) -> (i32, i32, i32) {
    %c0_i32 = arith.constant 0 : i32
    %c0_i32_0 = arith.constant 0 : i32
    return %arg0, %c0_i32, %arg1 : i32, i32, i32
  }
}

</mosaic_0001>

<llo_original>
// kernel: basic_conv2d.3
$region0: #{basic_conv2d.3}
  #allocation0 [shape = 'u32[]', space=smem, size = 0x4, offset = 0x4, fixed_abs, tag = 'smem constant byte address 0x4 - core index']
  #allocation1 [shape = 'u32[144,128]{1,0:T(1,128)}', space=vmem, size = 0x12000, scoped, tag = 'internal scratch']
  %s0 = inlined_call_operand.vmem [shape: f32[2,8,256], index: 0, kind: input, shape index: {}, may-alias: {0,3}]
  %s1 = inlined_call_operand.vmem [shape: f32[8,1], index: 1, kind: input, shape index: {}]
  %s2 = inlined_call_operand.vmem [shape: f32[8,1], index: 2, kind: input, shape index: {}]
  %s3 = inlined_call_operand.vmem [shape: f32[2,8,256], index: 3, kind: output, shape index: {}, may-alias: {0,3}]
  %s4 = sld [smem:[#allocation0]]
  $region45: #{basic_conv2d.3} parent=0
    _
  %s6 = ssub.s32 1, %s4
  %s7 = scalar_select 0, %s6, %s4
  loop: start=0, step=1, limit=4
  $region2: #{basic_conv2d.3} parent=0 // loop_pre_header
    _
  $region3: #{basic_conv2d.3} parent=0 // loop_header
    %s9 = sphi 0, %s13
    %p10 = scmp.ge.s32.totalorder %s9, 4
    %s16 = sphi 0, %s28
    %s17 = sphi 0, %s24
    %s18 = sphi 0, %s16
    %s19 = sphi 0, %s17
    %s20 = sphi 0, %s18
    %s21 = sphi 0, %s19
    %s33 = sphi 0, %s35
    %s36 = sphi 0, %s33
    %s37 = sphi 0, %s36
    %s53 = sphi 0, %s37
    %s57 = sphi 0, %s57
    %s59 = sphi 0, %s57
    %s60 = sphi 0, %s59
    %s74 = sphi 0, %s60
    %s78 = sphi 0, %s78
    %s80 = sphi 0, %s78
    %s81 = sphi 0, %s80
    %s95 = sphi 0, %s81
    %s103 = sphi 0, %s105
    %s106 = sphi 0, %s103
    %s107 = sphi 0, %s106
    %s123 = sphi 0, %s107
  $region4: #{basic_conv2d.3} parent=0 // loop_header_branch
    %12 = sbr.rel (%p10) target = $region8
  $region5: #{basic_conv2d.3} parent=0 // loop_body
    %s14 = ssub.s32 %s9, 1
    %s15 = ssub.s32 %s9, 2
    %s22 = sadd.s32 1, %s17
    %p23 = scmp.ge.s32.totalorder %s22, 1
    %s24 = scalar_select %p23, 0, %s22
    %s25 = sadd.s32 1, %s16
    %s26 = scalar_select %p23, %s25, %s16
    %p27 = scmp.ge.s32.totalorder %s26, 2
    %s28 = scalar_select %p27, 0, %s26
    %s29 = ssub.s32 %s16, %s28
    %s30 = ssub.s32 %s17, %s24
    %s31 = sor.u32 %s29, %s30
    %p32 = scmp.eq.s32.totalorder %s31, 0
    %s34 = sadd.s32 %s33, 1
    %s35 = scalar_select %p32, %s33, %s34
    %p38 = pneg %p32
    %p39 = scmp.eq.s32.totalorder %s9, 1
    %p40 = por %p38, %p39
    %p41 = scmp.ne.s32.totalorder %s33, %s36
    %p42 = scmp.eq.s32.totalorder %s9, 0
    %p43 = por %p41, %p42
    %p44 = scmp.ne.s32.totalorder %s33, %s36
    %p45 = scmp.eq.s32.totalorder %s14, 1
    %p46 = por %p44, %p45
    %p47 = scmp.ne.s32.totalorder %s36, %s37
    %p48 = scmp.eq.s32.totalorder %s14, 0
    %p49 = por %p47, %p48
    %p50 = scmp.ne.s32.totalorder %s36, %s37
    %p51 = scmp.eq.s32.totalorder %s15, 1
    %p52 = por %p50, %p51
    %p54 = scmp.ne.s32.totalorder %s37, %s53
    %p55 = scmp.eq.s32.totalorder %s15, 0
    %p56 = por %p54, %p55
    %s58 = sadd.s32 %s57, 1
    %p61 = scmp.eq.s32.totalorder %s9, 1
    %p62 = scmp.ne.s32.totalorder %s57, %s59
    %p63 = scmp.eq.s32.totalorder %s9, 0
    %p64 = por %p62, %p63
    %p65 = scmp.ne.s32.totalorder %s57, %s59
    %p66 = scmp.eq.s32.totalorder %s14, 1
    %p67 = por %p65, %p66
    %p68 = scmp.ne.s32.totalorder %s59, %s60
    %p69 = scmp.eq.s32.totalorder %s14, 0
    %p70 = por %p68, %p69
    %p71 = scmp.ne.s32.totalorder %s59, %s60
    %p72 = scmp.eq.s32.totalorder %s15, 1
    %p73 = por %p71, %p72
    %p75 = scmp.ne.s32.totalorder %s60, %s74
    %p76 = scmp.eq.s32.totalorder %s15, 0
    %p77 = por %p75, %p76
    %s79 = sadd.s32 %s78, 1
    %p82 = scmp.eq.s32.totalorder %s9, 1
    %p83 = scmp.ne.s32.totalorder %s78, %s80
    %p84 = scmp.eq.s32.totalorder %s9, 0
    %p85 = por %p83, %p84
    %p86 = scmp.ne.s32.totalorder %s78, %s80
    %p87 = scmp.eq.s32.totalorder %s14, 1
    %p88 = por %p86, %p87
    %p89 = scmp.ne.s32.totalorder %s80, %s81
    %p90 = scmp.eq.s32.totalorder %s14, 0
    %p91 = por %p89, %p90
    %p92 = scmp.ne.s32.totalorder %s80, %s81
    %p93 = scmp.eq.s32.totalorder %s15, 1
    %p94 = por %p92, %p93
    %p96 = scmp.ne.s32.totalorder %s81, %s95
    %p97 = scmp.eq.s32.totalorder %s15, 0
    %p98 = por %p96, %p97
    %s99 = ssub.s32 %s16, %s28
    %s100 = ssub.s32 %s17, %s24
    %s101 = sor.u32 %s99, %s100
    %p102 = scmp.eq.s32.totalorder %s101, 0
    %s104 = sadd.s32 %s103, 1
    %s105 = scalar_select %p102, %s103, %s104
    %p108 = pneg %p102
    %p109 = scmp.eq.s32.totalorder %s9, 1
    %p110 = por %p108, %p109
    %p111 = scmp.ne.s32.totalorder %s103, %s106
    %p112 = scmp.eq.s32.totalorder %s9, 0
    %p113 = por %p111, %p112
    %p114 = scmp.ne.s32.totalorder %s103, %s106
    %p115 = scmp.eq.s32.totalorder %s14, 1
    %p116 = por %p114, %p115
    %p117 = scmp.ne.s32.totalorder %s106, %s107
    %p118 = scmp.eq.s32.totalorder %s14, 0
    %p119 = por %p117, %p118
    %p120 = scmp.ne.s32.totalorder %s106, %s107
    %p121 = scmp.eq.s32.totalorder %s15, 1
    %p122 = por %p120, %p121
    %p124 = scmp.ne.s32.totalorder %s107, %s123
    %p125 = scmp.eq.s32.totalorder %s15, 0
    %p126 = por %p124, %p125
    %p127 = scmp.le.s32.totalorder 1, %s9
    %p128 = scmp.lt.s32.totalorder %s9, 3
    %p129 = pnand %p127, %p128
    %p130 = pneg %p129
    // Predicated region
    $region9: #{basic_conv2d.3} parent=5 // pred_check
      _
    $region10: #{basic_conv2d.3} parent=5 // pred_check_branch
      %132 = sbr.rel (%p129) target = $region12
    $region11: #{basic_conv2d.3} parent=5 // pred_region
      %s133 = ssub.s32 %s9, 1
      // Predicated region
      $region13: #{basic_conv2d.3} parent=11 // pred_check
        %p134 = pneg %p70
      $region14: #{basic_conv2d.3} parent=11 // pred_check_branch
        %136 = sbr.rel (%p134) target = $region16
      $region15: #{basic_conv2d.3} parent=11 // pred_region
        _
      $region16: #{basic_conv2d.3} parent=11 // pred_fallthru
        _
      // Predicated region
      $region17: #{basic_conv2d.3} parent=11 // pred_check
        %p137 = pneg %p91
      $region18: #{basic_conv2d.3} parent=11 // pred_check_branch
        %139 = sbr.rel (%p137) target = $region20
      $region19: #{basic_conv2d.3} parent=11 // pred_region
        _
      $region20: #{basic_conv2d.3} parent=11 // pred_fallthru
        _
    $region12: #{basic_conv2d.3} parent=5 // pred_fallthru
      _
    %p140 = scmp.lt.s32.totalorder %s9, 2
    // Predicated region
    $region21: #{basic_conv2d.3} parent=5 // pred_check
      %p141 = pneg %p140
    $region22: #{basic_conv2d.3} parent=5 // pred_check_branch
      %143 = sbr.rel (%p141) target = $region24
    $region23: #{basic_conv2d.3} parent=5 // pred_region
      // Predicated region
      $region25: #{basic_conv2d.3} parent=23 // pred_check
        %p144 = pneg %p43
      $region26: #{basic_conv2d.3} parent=23 // pred_check_branch
        %146 = sbr.rel (%p144) target = $region28
      $region27: #{basic_conv2d.3} parent=23 // pred_region
        %s147 = smul.u32 2, %s17
        %p148 = scmp.lt.s32.totalorder %s16, 1
        %s149 = scalar_select %p148, %s16, 1
        %p150 = scmp.lt.s32.totalorder %s147, 1
        %s151 = scalar_select %p150, %s147, 1
        %s152 = smul.addr %s149, 2
        %s153 = sadd.s32 %s151, %s152
        %s154 = smul.addr %s153, 8
        %s155 = scalar_lea.vmem %s0, %s154
        %s156 = smul.u32 2, %s17
      $region28: #{basic_conv2d.3} parent=23 // pred_fallthru
        _
    $region24: #{basic_conv2d.3} parent=5 // pred_fallthru
      _
    %p157 = scmp.le.s32.totalorder 1, %s9
    %p158 = scmp.lt.s32.totalorder %s9, 3
    %p159 = pnand %p157, %p158
    %p160 = pneg %p159
    // Predicated region
    $region29: #{basic_conv2d.3} parent=5 // pred_check
      _
    $region30: #{basic_conv2d.3} parent=5 // pred_check_branch
      %162 = sbr.rel (%p159) target = $region32
    $region31: #{basic_conv2d.3} parent=5 // pred_region
      %s163 = ssub.s32 %s9, 1
      %s164 = smul.u32 2, %s19
      %p165 = scmp.lt.s32.totalorder %s18, 1
      %s166 = scalar_select %p165, %s18, 1
      %p167 = scmp.lt.s32.totalorder %s164, 1
      %s168 = scalar_select %p167, %s164, 1
      %s169 = smul.addr %s166, 2
      %s170 = sadd.s32 %s168, %s169
      %s171 = smul.addr %s170, 8
      %s172 = scalar_lea.vmem %s0, %s171
      %p173 = pneg %p49
      %p174 = pneg %p46
      %p175 = pneg %p70
      %p176 = pneg %p67
      %p177 = pneg %p91
      %p178 = pneg %p88
      %p179 = pneg %p119
      %p180 = pneg %p116
      %s181 = smul.u32 2, %s19
      %p182 = scmp.lt.s32.totalorder %s18, 1
      %s183 = scalar_select %p182, %s18, 1
      %p184 = scmp.lt.s32.totalorder %s181, 1
      %s185 = scalar_select %p184, %s181, 1
      %s186 = smul.addr %s183, 2
      %s187 = sadd.s32 %s185, %s186
      %s188 = smul.addr %s187, 8
      %s189 = scalar_lea.vmem %s3, %s188
      %s190 = smul.u32 2, %s19
      %p191 = scmp.lt.s32.totalorder %s18, 1
      %s192 = scalar_select %p191, %s18, 1
      %p193 = scmp.lt.s32.totalorder %s190, 1
      %s194 = scalar_select %p193, %s190, 1
      %s195 = smul.addr %s192, 2
      %s196 = sadd.s32 %s194, %s195
      %s197 = smul.addr %s196, 8
      %s198 = scalar_lea.vmem %s0, %s197
      %s199 = smul.u32 2, %s19
      %s200 = smul.u32 2, %s19
      %p201 = scmp.lt.s32.totalorder %s18, 1
      %s202 = scalar_select %p201, %s18, 1
      %p203 = scmp.lt.s32.totalorder %s200, 1
      %s204 = scalar_select %p203, %s200, 1
      %s205 = smul.addr %s202, 2
      %s206 = sadd.s32 %s204, %s205
      %s207 = smul.addr %s206, 8
      %s208 = scalar_lea.vmem %s3, %s207
      %s209 = smul.u32 2, %s19
      %v210 = vld [vmem:[%s198] sm:$0xff]
      %v211 = vld [vmem:[%s198 + $0x8] sm:$0xff]
      %v212 = vld [vmem:[%s1] sm:$0xff]
      %214 = vset.pattern.permute.xlu0 0
      %215 = vperm.xlu0 %214, %v212
      %v216 = vpop.permute.xlu0 %215
      %v218 = vmul.f32 %v210, %v216
      %v219 = vmul.f32 %v211, %v216
      %v220 = vld [vmem:[%s2] sm:$0xff]
      %222 = vset.pattern.permute.xlu0 0
      %223 = vperm.xlu0 %222, %v220
      %v224 = vpop.permute.xlu0 %223
      %v226 = vadd.f32 %v218, %v224
      %v227 = vadd.f32 %v219, %v224
      %v228 = vmax.f32 %v226, 0.0
      %v229 = vmax.f32 %v227, 0.0
      %230 = vst [vmem:[%s208] sm:$0xff] %v228
      %231 = vst [vmem:[%s208 + $0x8] sm:$0xff] %v229
      %s232 = smul.u32 2, %s19
      %p233 = scmp.lt.s32.totalorder %s18, 1
      %s234 = scalar_select %p233, %s18, 1
      %p235 = scmp.lt.s32.totalorder %s232, 1
      %s236 = scalar_select %p235, %s232, 1
      %s237 = smul.addr %s234, 2
      %s238 = sadd.s32 %s236, %s237
      %s239 = smul.addr %s238, 8
      %s240 = scalar_lea.vmem %s3, %s239
      // Predicated region
      $region33: #{basic_conv2d.3} parent=31 // pred_check
        %p241 = pneg %p116
      $region34: #{basic_conv2d.3} parent=31 // pred_check_branch
        %243 = sbr.rel (%p241) target = $region36
      $region35: #{basic_conv2d.3} parent=31 // pred_region
        %s244 = smul.u32 2, %s19
      $region36: #{basic_conv2d.3} parent=31 // pred_fallthru
        _
    $region32: #{basic_conv2d.3} parent=5 // pred_fallthru
      _
    %p245 = scmp.le.s32.totalorder 2, %s9
    // Predicated region
    $region37: #{basic_conv2d.3} parent=5 // pred_check
      %p246 = pneg %p245
    $region38: #{basic_conv2d.3} parent=5 // pred_check_branch
      %248 = sbr.rel (%p246) target = $region40
    $region39: #{basic_conv2d.3} parent=5 // pred_region
      %s249 = ssub.s32 %s9, 2
      // Predicated region
      $region41: #{basic_conv2d.3} parent=39 // pred_check
        %p250 = pneg %p122
      $region42: #{basic_conv2d.3} parent=39 // pred_check_branch
        %252 = sbr.rel (%p250) target = $region44
      $region43: #{basic_conv2d.3} parent=39 // pred_region
        %s253 = smul.u32 2, %s21
        %p254 = scmp.lt.s32.totalorder %s20, 1
        %s255 = scalar_select %p254, %s20, 1
        %p256 = scmp.lt.s32.totalorder %s253, 1
        %s257 = scalar_select %p256, %s253, 1
        %s258 = smul.addr %s255, 2
        %s259 = sadd.s32 %s257, %s258
        %s260 = smul.addr %s259, 8
        %s261 = scalar_lea.vmem %s3, %s260
      $region44: #{basic_conv2d.3} parent=39 // pred_fallthru
        _
    $region40: #{basic_conv2d.3} parent=5 // pred_fallthru
      _
  $region6: #{basic_conv2d.3} parent=0 // loop_footer
    %s13 = sadd.s32 1, %s9
  $region7: #{basic_conv2d.3} parent=0 // loop_footer_branch
    %8 = sbr.rel target = $region3
  $region8: #{basic_conv2d.3} parent=0 // loop_exit
    _

// kernel: basic_conv2d.2
$region0: #{basic_conv2d.2}
  #allocation0 [shape = 'u32[]', space=smem, size = 0x4, offset = 0x4, fixed_abs, tag = 'smem constant byte address 0x4 - core index']
  #allocation1 [shape = 'u32[144,128]{1,0:T(1,128)}', space=vmem, size = 0x12000, scoped, tag = 'internal scratch']
  #allocation2 [shape = 'bf16[36,288]{1,0:T(8,128)(2,1)}', space=vmem, size = 0x7800, scoped, tag = 'scratch operand']
  %s0 = inlined_call_operand.vmem [shape: bf16[2,4,342], index: 0, kind: input, shape index: {}]
  %s1 = inlined_call_operand.vmem [shape: bf16[8,36], index: 1, kind: input, shape index: {}]
  %s2 = inlined_call_operand.vmem [shape: f32[2,8,256], index: 2, kind: output, shape index: {0}]
  %s3 = inlined_call_operand.vmem [shape: f32[2,8,1], index: 3, kind: output, shape index: {1}]
  %s4 = inlined_call_operand.vmem [shape: f32[2,8,1], index: 4, kind: output, shape index: {2}]
  %5 = xla_tuple %s2, %s3, %s4
  %s6 = sld [smem:[#allocation0]]
  $region57: #{basic_conv2d.2} parent=0
    _
  %s8 = ssub.s32 1, %s6
  %s9 = scalar_select 0, %s8, %s6
  loop: start=0, step=1, limit=4
  $region2: #{basic_conv2d.2} parent=0 // loop_pre_header
    _
  $region3: #{basic_conv2d.2} parent=0 // loop_header
    %s11 = sphi 0, %s15
    %p12 = scmp.ge.s32.totalorder %s11, 4
    %s18 = sphi 0, %s30
    %s19 = sphi 0, %s26
    %s20 = sphi 0, %s18
    %s21 = sphi 0, %s19
    %s22 = sphi 0, %s20
    %s23 = sphi 0, %s21
    %s33 = sphi 0, %s35
    %s36 = sphi 0, %s33
    %s37 = sphi 0, %s36
    %s53 = sphi 0, %s37
    %s57 = sphi 0, %s57
    %s59 = sphi 0, %s57
    %s60 = sphi 0, %s59
    %s74 = sphi 0, %s60
    %s82 = sphi 0, %s84
    %s85 = sphi 0, %s82
    %s86 = sphi 0, %s85
    %s102 = sphi 0, %s86
    %s110 = sphi 0, %s112
    %s113 = sphi 0, %s110
    %s114 = sphi 0, %s113
    %s130 = sphi 0, %s114
    %s138 = sphi 0, %s140
    %s141 = sphi 0, %s138
    %s142 = sphi 0, %s141
    %s158 = sphi 0, %s142
  $region4: #{basic_conv2d.2} parent=0 // loop_header_branch
    %14 = sbr.rel (%p12) target = $region8
  $region5: #{basic_conv2d.2} parent=0 // loop_body
    %s16 = ssub.s32 %s11, 1
    %s17 = ssub.s32 %s11, 2
    %s24 = sadd.s32 1, %s19
    %p25 = scmp.ge.s32.totalorder %s24, 1
    %s26 = scalar_select %p25, 0, %s24
    %s27 = sadd.s32 1, %s18
    %s28 = scalar_select %p25, %s27, %s18
    %p29 = scmp.ge.s32.totalorder %s28, 2
    %s30 = scalar_select %p29, 0, %s28
    %s31 = ssub.s32 %s18, %s30
    %p32 = scmp.eq.s32.totalorder %s31, 0
    %s34 = sadd.s32 %s33, 1
    %s35 = scalar_select %p32, %s33, %s34
    %p38 = pneg %p32
    %p39 = scmp.eq.s32.totalorder %s11, 1
    %p40 = por %p38, %p39
    %p41 = scmp.ne.s32.totalorder %s33, %s36
    %p42 = scmp.eq.s32.totalorder %s11, 0
    %p43 = por %p41, %p42
    %p44 = scmp.ne.s32.totalorder %s33, %s36
    %p45 = scmp.eq.s32.totalorder %s16, 1
    %p46 = por %p44, %p45
    %p47 = scmp.ne.s32.totalorder %s36, %s37
    %p48 = scmp.eq.s32.totalorder %s16, 0
    %p49 = por %p47, %p48
    %p50 = scmp.ne.s32.totalorder %s36, %s37
    %p51 = scmp.eq.s32.totalorder %s17, 1
    %p52 = por %p50, %p51
    %p54 = scmp.ne.s32.totalorder %s37, %s53
    %p55 = scmp.eq.s32.totalorder %s17, 0
    %p56 = por %p54, %p55
    %s58 = sadd.s32 %s57, 1
    %p61 = scmp.eq.s32.totalorder %s11, 1
    %p62 = scmp.ne.s32.totalorder %s57, %s59
    %p63 = scmp.eq.s32.totalorder %s11, 0
    %p64 = por %p62, %p63
    %p65 = scmp.ne.s32.totalorder %s57, %s59
    %p66 = scmp.eq.s32.totalorder %s16, 1
    %p67 = por %p65, %p66
    %p68 = scmp.ne.s32.totalorder %s59, %s60
    %p69 = scmp.eq.s32.totalorder %s16, 0
    %p70 = por %p68, %p69
    %p71 = scmp.ne.s32.totalorder %s59, %s60
    %p72 = scmp.eq.s32.totalorder %s17, 1
    %p73 = por %p71, %p72
    %p75 = scmp.ne.s32.totalorder %s60, %s74
    %p76 = scmp.eq.s32.totalorder %s17, 0
    %p77 = por %p75, %p76
    %s78 = ssub.s32 %s18, %s30
    %s79 = ssub.s32 %s19, %s26
    %s80 = sor.u32 %s78, %s79
    %p81 = scmp.eq.s32.totalorder %s80, 0
    %s83 = sadd.s32 %s82, 1
    %s84 = scalar_select %p81, %s82, %s83
    %p87 = pneg %p81
    %p88 = scmp.eq.s32.totalorder %s11, 1
    %p89 = por %p87, %p88
    %p90 = scmp.ne.s32.totalorder %s82, %s85
    %p91 = scmp.eq.s32.totalorder %s11, 0
    %p92 = por %p90, %p91
    %p93 = scmp.ne.s32.totalorder %s82, %s85
    %p94 = scmp.eq.s32.totalorder %s16, 1
    %p95 = por %p93, %p94
    %p96 = scmp.ne.s32.totalorder %s85, %s86
    %p97 = scmp.eq.s32.totalorder %s16, 0
    %p98 = por %p96, %p97
    %p99 = scmp.ne.s32.totalorder %s85, %s86
    %p100 = scmp.eq.s32.totalorder %s17, 1
    %p101 = por %p99, %p100
    %p103 = scmp.ne.s32.totalorder %s86, %s102
    %p104 = scmp.eq.s32.totalorder %s17, 0
    %p105 = por %p103, %p104
    %s106 = sadd.s32 %s18, %s19
    %s107 = sadd.s32 %s30, %s26
    %s108 = ssub.s32 %s106, %s107
    %p109 = scmp.eq.s32.totalorder %s108, 0
    %s111 = sadd.s32 %s110, 1
    %s112 = scalar_select %p109, %s110, %s111
    %p115 = pneg %p109
    %p116 = scmp.eq.s32.totalorder %s11, 1
    %p117 = por %p115, %p116
    %p118 = scmp.ne.s32.totalorder %s110, %s113
    %p119 = scmp.eq.s32.totalorder %s11, 0
    %p120 = por %p118, %p119
    %p121 = scmp.ne.s32.totalorder %s110, %s113
    %p122 = scmp.eq.s32.totalorder %s16, 1
    %p123 = por %p121, %p122
    %p124 = scmp.ne.s32.totalorder %s113, %s114
    %p125 = scmp.eq.s32.totalorder %s16, 0
    %p126 = por %p124, %p125
    %p127 = scmp.ne.s32.totalorder %s113, %s114
    %p128 = scmp.eq.s32.totalorder %s17, 1
    %p129 = por %p127, %p128
    %p131 = scmp.ne.s32.totalorder %s114, %s130
    %p132 = scmp.eq.s32.totalorder %s17, 0
    %p133 = por %p131, %p132
    %s134 = sadd.s32 %s18, %s19
    %s135 = sadd.s32 %s30, %s26
    %s136 = ssub.s32 %s134, %s135
    %p137 = scmp.eq.s32.totalorder %s136, 0
    %s139 = sadd.s32 %s138, 1
    %s140 = scalar_select %p137, %s138, %s139
    %p143 = pneg %p137
    %p144 = scmp.eq.s32.totalorder %s11, 1
    %p145 = por %p143, %p144
    %p146 = scmp.ne.s32.totalorder %s138, %s141
    %p147 = scmp.eq.s32.totalorder %s11, 0
    %p148 = por %p146, %p147
    %p149 = scmp.ne.s32.totalorder %s138, %s141
    %p150 = scmp.eq.s32.totalorder %s16, 1
    %p151 = por %p149, %p150
    %p152 = scmp.ne.s32.totalorder %s141, %s142
    %p153 = scmp.eq.s32.totalorder %s16, 0
    %p154 = por %p152, %p153
    %p155 = scmp.ne.s32.totalorder %s141, %s142
    %p156 = scmp.eq.s32.totalorder %s17, 1
    %p157 = por %p155, %p156
    %p159 = scmp.ne.s32.totalorder %s142, %s158
    %p160 = scmp.eq.s32.totalorder %s17, 0
    %p161 = por %p159, %p160
    %p162 = scmp.le.s32.totalorder 1, %s11
    %p163 = scmp.lt.s32.totalorder %s11, 3
    %p164 = pnand %p162, %p163
    %p165 = pneg %p164
    // Predicated region
    $region9: #{basic_conv2d.2} parent=5 // pred_check
      _
    $region10: #{basic_conv2d.2} parent=5 // pred_check_branch
      %167 = sbr.rel (%p164) target = $region12
    $region11: #{basic_conv2d.2} parent=5 // pred_region
      %s168 = ssub.s32 %s11, 1
      // Predicated region
      $region13: #{basic_conv2d.2} parent=11 // pred_check
        %p169 = pneg %p70
      $region14: #{basic_conv2d.2} parent=11 // pred_check_branch
        %171 = sbr.rel (%p169) target = $region16
      $region15: #{basic_conv2d.2} parent=11 // pred_region
        _
      $region16: #{basic_conv2d.2} parent=11 // pred_fallthru
        _
    $region12: #{basic_conv2d.2} parent=5 // pred_fallthru
      _
    %p172 = scmp.lt.s32.totalorder %s11, 2
    // Predicated region
    $region17: #{basic_conv2d.2} parent=5 // pred_check
      %p173 = pneg %p172
    $region18: #{basic_conv2d.2} parent=5 // pred_check_branch
      %175 = sbr.rel (%p173) target = $region20
    $region19: #{basic_conv2d.2} parent=5 // pred_region
      // Predicated region
      $region21: #{basic_conv2d.2} parent=19 // pred_check
        %p176 = pneg %p43
      $region22: #{basic_conv2d.2} parent=19 // pred_check_branch
        %178 = sbr.rel (%p176) target = $region24
      $region23: #{basic_conv2d.2} parent=19 // pred_region
        %p179 = scmp.lt.s32.totalorder %s18, 1
        %s180 = scalar_select %p179, %s18, 1
        %s181 = smul.addr %s180, 3
        %s182 = smul.addr %s181, 2
        %s183 = scalar_lea.vmem %s0, %s182
      $region24: #{basic_conv2d.2} parent=19 // pred_fallthru
        _
    $region20: #{basic_conv2d.2} parent=5 // pred_fallthru
      _
    %p184 = scmp.le.s32.totalorder 1, %s11
    %p185 = scmp.lt.s32.totalorder %s11, 3
    %p186 = pnand %p184, %p185
    %p187 = pneg %p186
    // Predicated region
    $region25: #{basic_conv2d.2} parent=5 // pred_check
      _
    $region26: #{basic_conv2d.2} parent=5 // pred_check_branch
      %189 = sbr.rel (%p186) target = $region28
    $region27: #{basic_conv2d.2} parent=5 // pred_region
      %s190 = ssub.s32 %s11, 1
      %p191 = scmp.lt.s32.totalorder %s20, 1
      %s192 = scalar_select %p191, %s20, 1
      %s193 = smul.addr %s192, 3
      %s194 = smul.addr %s193, 2
      %s195 = scalar_lea.vmem %s0, %s194
      %p196 = pneg %p49
      %p197 = pneg %p46
      %p198 = pneg %p70
      %p199 = pneg %p67
      %p200 = pneg %p98
      %p201 = pneg %p95
      %s202 = smul.u32 2, %s21
      %p203 = scmp.lt.s32.totalorder %s20, 1
      %s204 = scalar_select %p203, %s20, 1
      %p205 = scmp.lt.s32.totalorder %s202, 1
      %s206 = scalar_select %p205, %s202, 1
      %s207 = smul.addr %s204, 2
      %s208 = sadd.s32 %s206, %s207
      %s209 = smul.addr %s208, 8
      %s210 = scalar_lea.vmem %s2, %s209
      %p211 = pneg %p126
      %p212 = pneg %p123
      %s213 = sadd.s32 %s20, %s21
      %p214 = scmp.lt.s32.totalorder %s213, 1
      %s215 = scalar_select %p214, %s213, 1
      %s216 = smul.addr %s215, 8
      %s217 = scalar_lea.vmem %s3, %s216
      %p218 = pneg %p154
      %p219 = pneg %p151
      %s220 = sadd.s32 %s20, %s21
      %p221 = scmp.lt.s32.totalorder %s220, 1
      %s222 = scalar_select %p221, %s220, 1
      %s223 = smul.addr %s222, 8
      %s224 = scalar_lea.vmem %s4, %s223
      %p225 = scmp.lt.s32.totalorder %s20, 1
      %s226 = scalar_select %p225, %s20, 1
      %s227 = smul.addr %s226, 3
      %s228 = smul.addr %s227, 2
      %s229 = scalar_lea.vmem %s0, %s228
      %s230 = smul.u32 2, %s21
      %p231 = scmp.lt.s32.totalorder %s20, 1
      %s232 = scalar_select %p231, %s20, 1
      %p233 = scmp.lt.s32.totalorder %s230, 1
      %s234 = scalar_select %p233, %s230, 1
      %s235 = smul.addr %s232, 2
      %s236 = sadd.s32 %s234, %s235
      %s237 = smul.addr %s236, 8
      %s238 = scalar_lea.vmem %s2, %s237
      %s239 = smul.u32 2, %s21
      %s240 = sadd.s32 %s20, %s21
      %p241 = scmp.lt.s32.totalorder %s240, 1
      %s242 = scalar_select %p241, %s240, 1
      %s243 = smul.addr %s242, 8
      %s244 = scalar_lea.vmem %s3, %s243
      %s245 = sadd.s32 %s20, %s21
      %s246 = sadd.s32 %s20, %s21
      %p247 = scmp.lt.s32.totalorder %s246, 1
      %s248 = scalar_select %p247, %s246, 1
      %s249 = smul.addr %s248, 8
      %s250 = scalar_lea.vmem %s4, %s249
      %s251 = sadd.s32 %s20, %s21
      %v253 = vld [vmem:[%s229] sm:$0x3f]
      %v255 = vcombine.high %v253, %v253
      %v257 = vunpack.c.l.s4 1983009808
      %v258 = vunpack.c.0.s8 %v257
      %v259 = vlaneseq
      %v260 = vshrl.u32 %v259, 7
      %v261 = vsub.s32 %v258, %v260
      %v262 = vrot.slane %v253, %v261
      %v264 = vunpack.c.l.s4 1983009808
      %v265 = vunpack.c.0.s8 %v264
      %v266 = vlaneseq
      %v267 = vshrl.u32 %v266, 7
      %v268 = vsub.s32 %v265, %v267
      %v269 = vrot.slane %v255, %v268
      %272 = vst [vmem:[#allocation2] sm:$0x33] %v262
      %vm273 = vcmask 254976
      %274 = vst.msk [vmem:[#allocation2 + $0x8] sm:$0x3] %vm273, %v269
      %v275 = vld [vmem:[%s229] sm:$0x3f]
      %v277 = vcombine.low %v275, %v275
      %v279 = vunpack.c.l.s4 1983009808
      %v280 = vunpack.c.0.s8 %v279
      %v281 = vlaneseq
      %v282 = vshrl.u32 %v281, 7
      %v283 = vsub.s32 %v280, %v282
      %v284 = vrot.slane %v277, %v283
      %v286 = vunpack.c.l.s4 1983009808
      %v287 = vunpack.c.0.s8 %v286
      %v288 = vlaneseq
      %v289 = vshrl.u32 %v288, 7
      %v290 = vsub.s32 %v287, %v289
      %v291 = vrot.slane %v275, %v290
      %292 = vrot.lane.b32.xlu0 %v284, 127
      %v293 = vpop.permute.xlu0 %292
      %294 = vrot.lane.b32.xlu0 %v291, 127
      %v295 = vpop.permute.xlu0 %294
      %v296 = vrot.slane %v293, 4
      %v297 = vrot.slane %v295, 4
      %vm298 = vcmask 1043456
      %v299 = vsel %vm298, %v296, %v297
      %vm300 = vcmask 1039360
      %v301 = vsel %vm300, %v293, %v299
      %304 = vst [vmem:[#allocation2] sm:$0xcc] %v301
      %vm305 = vcmask 257026
      %306 = vst.msk [vmem:[#allocation2 + $0x8] sm:$0xc] %vm305, %v295
      %v307 = vld [vmem:[%s229] sm:$0x3f]
      %v309 = vcombine.high %v307, %v307
      %v311 = vunpack.c.l.s4 1983009808
      %v312 = vunpack.c.0.s8 %v311
      %v313 = vlaneseq
      %v314 = vshrl.u32 %v313, 7
      %v315 = vsub.s32 %v312, %v314
      %v316 = vrot.slane %v307, %v315
      %v318 = vunpack.c.l.s4 1983009808
      %v319 = vunpack.c.0.s8 %v318
      %v320 = vlaneseq
      %v321 = vshrl.u32 %v320, 7
      %v322 = vsub.s32 %v319, %v321
      %v323 = vrot.slane %v309, %v322
      %324 = vrot.lane.b32.xlu0 %v316, 126
      %v325 = vpop.permute.xlu0 %324
      %326 = vrot.lane.b32.xlu0 %v323, 126
      %v327 = vpop.permute.xlu0 %326
      %v328 = vrot.slane %v325, 4
      %v329 = vrot.slane %v327, 4
      %v330 = vsel %vm298, %v328, %v329
      %vm331 = vcmask 1031168
      %v332 = vsel %vm331, %v325, %v330
      %335 = vst [vmem:[#allocation2 + $0xc] sm:$0x33] %v332
      %336 = vst.msk [vmem:[#allocation2 + $0x14] sm:$0x3] %vm273, %v327
      %v337 = vld [vmem:[%s229] sm:$0x3f]
      %v339 = vcombine.low %v337, %v337
      %v341 = vunpack.c.l.s4 1983009808
      %v342 = vunpack.c.0.s8 %v341
      %v343 = vlaneseq
      %v344 = vshrl.u32 %v343, 7
      %v345 = vsub.s32 %v342, %v344
      %v346 = vrot.slane %v339, %v345
      %v348 = vunpack.c.l.s4 1983009808
      %v349 = vunpack.c.0.s8 %v348
      %v350 = vlaneseq
      %v351 = vshrl.u32 %v350, 7
      %v352 = vsub.s32 %v349, %v351
      %v353 = vrot.slane %v337, %v352
      %354 = vrot.lane.b32.xlu0 %v346, 110
      %v355 = vpop.permute.xlu0 %354
      %356 = vrot.lane.b32.xlu0 %v353, 110
      %v357 = vpop.permute.xlu0 %356
      %v358 = vrot.slane %v355, 4
      %v359 = vrot.slane %v357, 4
      %v360 = vsel %vm298, %v358, %v359
      %vm361 = vcmask 900096
      %v362 = vsel %vm361, %v355, %v360
      %365 = vst [vmem:[#allocation2 + $0xc] sm:$0xcc] %v362
      %366 = vst.msk [vmem:[#allocation2 + $0x14] sm:$0xc] %vm305, %v357
      %v367 = vld [vmem:[%s229] sm:$0x3f]
      %v369 = vcombine.high %v367, %v367
      %v371 = vunpack.c.l.s4 1983009808
      %v372 = vunpack.c.0.s8 %v371
      %v373 = vlaneseq
      %v374 = vshrl.u32 %v373, 7
      %v375 = vsub.s32 %v372, %v374
      %v376 = vrot.slane %v367, %v375
      %v378 = vunpack.c.l.s4 1983009808
      %v379 = vunpack.c.0.s8 %v378
      %v380 = vlaneseq
      %v381 = vshrl.u32 %v380, 7
      %v382 = vsub.s32 %v379, %v381
      %v383 = vrot.slane %v369, %v382
      %384 = vrot.lane.b32.xlu0 %v376, 109
      %v385 = vpop.permute.xlu0 %384
      %386 = vrot.lane.b32.xlu0 %v383, 109
      %v387 = vpop.permute.xlu0 %386
      %v388 = vrot.slane %v385, 4
      %v389 = vrot.slane %v387, 4
      %v390 = vsel %vm298, %v388, %v389
      %vm391 = vcmask 891904
      %v392 = vsel %vm391, %v385, %v390
      %395 = vst [vmem:[#allocation2 + $0x18] sm:$0x33] %v392
      %396 = vst.msk [vmem:[#allocation2 + $0x20] sm:$0x3] %vm273, %v387
      %v397 = vld [vmem:[%s229] sm:$0x3f]
      %v399 = vcombine.low %v397, %v397
      %v401 = vunpack.c.l.s4 1983009808
      %v402 = vunpack.c.0.s8 %v401
      %v403 = vlaneseq
      %v404 = vshrl.u32 %v403, 7
      %v405 = vsub.s32 %v402, %v404
      %v406 = vrot.slane %v399, %v405
      %v408 = vunpack.c.l.s4 1983009808
      %v409 = vunpack.c.0.s8 %v408
      %v410 = vlaneseq
      %v411 = vshrl.u32 %v410, 7
      %v412 = vsub.s32 %v409, %v411
      %v413 = vrot.slane %v397, %v412
      %414 = vrot.lane.b32.xlu0 %v406, 108
      %v415 = vpop.permute.xlu0 %414
      %416 = vrot.lane.b32.xlu0 %v413, 108
      %v417 = vpop.permute.xlu0 %416
      %v418 = vrot.slane %v415, 4
      %v419 = vrot.slane %v417, 4
      %v420 = vsel %vm298, %v418, %v419
      %vm421 = vcmask 883712
      %v422 = vsel %vm421, %v415, %v420
      %425 = vst [vmem:[#allocation2 + $0x18] sm:$0xcc] %v422
      %426 = vst.msk [vmem:[#allocation2 + $0x20] sm:$0xc] %vm305, %v417
      %v427 = vld [vmem:[%s229] sm:$0x3f]
      %v429 = vcombine.high %v427, %v427
      %v431 = vunpack.c.l.s4 1983009808
      %v432 = vunpack.c.0.s8 %v431
      %v433 = vlaneseq
      %v434 = vshrl.u32 %v433, 7
      %v435 = vsub.s32 %v432, %v434
      %v436 = vrot.slane %v427, %v435
      %v438 = vunpack.c.l.s4 1983009808
      %v439 = vunpack.c.0.s8 %v438
      %v440 = vlaneseq
      %v441 = vshrl.u32 %v440, 7
      %v442 = vsub.s32 %v439, %v441
      %v443 = vrot.slane %v429, %v442
      %444 = vrot.lane.b32.xlu0 %v436, 92
      %v445 = vpop.permute.xlu0 %444
      %446 = vrot.lane.b32.xlu0 %v443, 92
      %v447 = vpop.permute.xlu0 %446
      %v448 = vrot.slane %v445, 4
      %v449 = vrot.slane %v447, 4
      %v450 = vsel %vm298, %v448, %v449
      %vm451 = vcmask 752640
      %v452 = vsel %vm451, %v445, %v450
      %455 = vst [vmem:[#allocation2 + $0x24] sm:$0x33] %v452
      %456 = vst.msk [vmem:[#allocation2 + $0x2c] sm:$0x3] %vm273, %v447
      %v457 = vld [vmem:[%s229] sm:$0x3f]
      %v459 = vcombine.low %v457, %v457
      %v461 = vunpack.c.l.s4 1983009808
      %v462 = vunpack.c.0.s8 %v461
      %v463 = vlaneseq
      %v464 = vshrl.u32 %v463, 7
      %v465 = vsub.s32 %v462, %v464
      %v466 = vrot.slane %v459, %v465
      %v468 = vunpack.c.l.s4 1983009808
      %v469 = vunpack.c.0.s8 %v468
      %v470 = vlaneseq
      %v471 = vshrl.u32 %v470, 7
      %v472 = vsub.s32 %v469, %v471
      %v473 = vrot.slane %v457, %v472
      %474 = vrot.lane.b32.xlu0 %v466, 91
      %v475 = vpop.permute.xlu0 %474
      %476 = vrot.lane.b32.xlu0 %v473, 91
      %v477 = vpop.permute.xlu0 %476
      %v478 = vrot.slane %v475, 4
      %v479 = vrot.slane %v477, 4
      %v480 = vsel %vm298, %v478, %v479
      %vm481 = vcmask 744448
      %v482 = vsel %vm481, %v475, %v480
      %485 = vst [vmem:[#allocation2 + $0x24] sm:$0xcc] %v482
      %486 = vst.msk [vmem:[#allocation2 + $0x2c] sm:$0xc] %vm305, %v477
      %v487 = vld [vmem:[%s229] sm:$0x3f]
      %v489 = vcombine.high %v487, %v487
      %v491 = vunpack.c.l.s4 1983009808
      %v492 = vunpack.c.0.s8 %v491
      %v493 = vlaneseq
      %v494 = vshrl.u32 %v493, 7
      %v495 = vsub.s32 %v492, %v494
      %v496 = vrot.slane %v487, %v495
      %v498 = vunpack.c.l.s4 1983009808
      %v499 = vunpack.c.0.s8 %v498
      %v500 = vlaneseq
      %v501 = vshrl.u32 %v500, 7
      %v502 = vsub.s32 %v499, %v501
      %v503 = vrot.slane %v489, %v502
      %504 = vrot.lane.b32.xlu0 %v496, 90
      %v505 = vpop.permute.xlu0 %504
      %506 = vrot.lane.b32.xlu0 %v503, 90
      %v507 = vpop.permute.xlu0 %506
      %v508 = vrot.slane %v505, 4
      %v509 = vrot.slane %v507, 4
      %v510 = vsel %vm298, %v508, %v509
      %vm511 = vcmask 736256
      %v512 = vsel %vm511, %v505, %v510
      %515 = vst [vmem:[#allocation2 + $0x30] sm:$0x33] %v512
      %516 = vst.msk [vmem:[#allocation2 + $0x38] sm:$0x3] %vm273, %v507
      %v517 = vld [vmem:[%s1] sm:$0xf]
      %v518 = vld [vmem:[#allocation2] sm:$0xff]
      %v519 = vld [vmem:[#allocation2 + $0x8] sm:$0xf]
      %v520 = vld [vmem:[#allocation2 + $0xc] sm:$0xff]
      %v521 = vld [vmem:[#allocation2 + $0x14] sm:$0xf]
      %v522 = vld [vmem:[#allocation2 + $0x18] sm:$0xff]
      %v523 = vld [vmem:[#allocation2 + $0x20] sm:$0xf]
      %v524 = vld [vmem:[#allocation2 + $0x24] sm:$0xff]
      %v525 = vld [vmem:[#allocation2 + $0x2c] sm:$0xf]
      %v526 = vld [vmem:[#allocation2 + $0x30] sm:$0x33]
      %v527 = vld [vmem:[#allocation2 + $0x38] sm:$0x3]
      %v538 = vunpack.c.l.b16 %v518
      %v539 = vunpack.c.h.b16 %v518
      %v540 = vunpack.c.l.b16 %v519
      %v541 = vunpack.c.l.b16 %v520
      %v542 = vunpack.c.h.b16 %v520
      %v543 = vunpack.c.l.b16 %v521
      %v544 = vunpack.c.l.b16 %v522
      %v545 = vunpack.c.h.b16 %v522
      %v546 = vunpack.c.l.b16 %v523
      %v547 = vunpack.c.l.b16 %v524
      %v548 = vunpack.c.h.b16 %v524
      %v549 = vunpack.c.l.b16 %v525
      %v550 = vunpack.c.l.b16 %v526
      %v551 = vunpack.c.h.b16 %v526
      %v552 = vunpack.c.l.b16 %v527
      %v553 = vpack.c.b16 %v541, %v538
      %v554 = vpack.c.b16 %v542, %v539
      %v555 = vpack.c.b16 %v543, %v540
      %v556 = vpack.c.b16 %v547, %v544
      %v557 = vpack.c.b16 %v548, %v545
      %v558 = vpack.c.b16 %v549, %v546
      %v559 = vpack.c.b16 %v550, %v550
      %v560 = vpack.c.b16 %v551, %v551
      %v561 = vpack.c.b16 %v552, %v552
      %vm568 = vcmask 293888
      %v570 = vsel %vm568, %v517, 0
      %vm572 = vcmask 1041408
      %v574 = vsel %vm572, %v559, 0
      %v577 = vsel %vm572, %v560, 0
      %v580 = vsel %vm572, %v561, 0
      %582 = vmatprep.subr.bf16.mxu0 0
      %583 = vmatpush1.bf16.msra.mxu0 0
      %584 = vmatprep.subr.bf16.mxu0 0
      %585 = vmatpush1.bf16.msra.mxu0 0
      %586 = vmatprep.subr.bf16.mxu0 0
      %587 = vmatpush1.bf16.msra.mxu0 0
      %588 = vmatprep.subr.bf16.mxu0 0
      %589 = vmatpush1.bf16.msra.mxu0 0
      %590 = vmatprep.subr.bf16.mxu0 0
      %591 = vmatpush1.bf16.msra.mxu0 0
      %592 = vmatprep.subr.bf16.mxu0 %v577
      %593 = vmatpush1.bf16.msra.mxu0 %v574
      %594 = vmatprep.subr.bf16.mxu0 %v557
      %595 = vmatpush1.bf16.msra.mxu0 %v556
      %596 = vmatprep.subr.bf16.mxu0 %v554
      %597 = vmatpush1.bf16.msra.mxu0 %v553
      %598 = vmatprep.subr.bf16.mxu0 0
      %599 = vmatpush2.bf16.msra.mxu0 0
      %600 = vmatprep.subr.bf16.mxu0 0
      %601 = vmatpush2.bf16.msra.mxu0 0
      %602 = vmatprep.subr.bf16.mxu0 0
      %603 = vmatpush2.bf16.msra.mxu0 0
      %604 = vmatprep.subr.bf16.mxu0 0
      %605 = vmatpush2.bf16.msra.mxu0 0
      %606 = vmatprep.subr.bf16.mxu0 0
      %607 = vmatpush2.bf16.msra.mxu0 0
      %608 = vmatprep.subr.bf16.mxu0 0
      %609 = vmatpush2.bf16.msra.mxu0 0
      %610 = vmatprep.subr.bf16.mxu0 0
      %611 = vmatpush2.bf16.msra.mxu0 0
      %612 = vmatprep.subr.bf16.mxu0 0
      %613 = vmatpush2.bf16.msra.mxu0 0
      %614 = vmatprep.mubr.bf16.mxu0 0
      %615 = vmatmul.mubr.bf16.gmra.mxu0 %v570
      %v616 = vpop.f32.mrf.mxu0
      %v617 = vadd.f32 0.0, %v616
      %v618 = vpop.f32.mrf.mxu0
      %v619 = vadd.f32 0.0, %v618
      %v620 = vpop.f32.mrf.mxu0
      %v621 = vpop.f32.mrf.mxu0
      %622 = vdwg.mxu0
      %623 = vmatprep.subr.bf16.mxu0 0
      %624 = vmatpush1.bf16.msra.mxu0 0
      %625 = vmatprep.subr.bf16.mxu0 0
      %626 = vmatpush1.bf16.msra.mxu0 0
      %627 = vmatprep.subr.bf16.mxu0 0
      %628 = vmatpush1.bf16.msra.mxu0 0
      %629 = vmatprep.subr.bf16.mxu0 0
      %630 = vmatpush1.bf16.msra.mxu0 0
      %631 = vmatprep.subr.bf16.mxu0 0
      %632 = vmatpush1.bf16.msra.mxu0 0
      %633 = vmatprep.subr.bf16.mxu0 0
      %634 = vmatpush1.bf16.msra.mxu0 %v580
      %635 = vmatprep.subr.bf16.mxu0 0
      %636 = vmatpush1.bf16.msra.mxu0 %v558
      %637 = vmatprep.subr.bf16.mxu0 0
      %638 = vmatpush1.bf16.msra.mxu0 %v555
      %639 = vmatprep.subr.bf16.mxu0 0
      %640 = vmatpush2.bf16.msra.mxu0 0
      %641 = vmatprep.subr.bf16.mxu0 0
      %642 = vmatpush2.bf16.msra.mxu0 0
      %643 = vmatprep.subr.bf16.mxu0 0
      %644 = vmatpush2.bf16.msra.mxu0 0
      %645 = vmatprep.subr.bf16.mxu0 0
      %646 = vmatpush2.bf16.msra.mxu0 0
      %647 = vmatprep.subr.bf16.mxu0 0
      %648 = vmatpush2.bf16.msra.mxu0 0
      %649 = vmatprep.subr.bf16.mxu0 0
      %650 = vmatpush2.bf16.msra.mxu0 0
      %651 = vmatprep.subr.bf16.mxu0 0
      %652 = vmatpush2.bf16.msra.mxu0 0
      %653 = vmatprep.subr.bf16.mxu0 0
      %654 = vmatpush2.bf16.msra.mxu0 0
      %655 = vmatprep.mubr.bf16.mxu0 0
      %656 = vmatmul.mubr.bf16.gmra.mxu0 %v570
      %v657 = vpop.f32.mrf.mxu0
      %v658 = vadd.f32 0.0, %v657
      %v659 = vpop.f32.mrf.mxu0
      %v660 = vpop.f32.mrf.mxu0
      %v661 = vpop.f32.mrf.mxu0
      %662 = vdwg.mxu0
      %vm663 = vcmask 130048
      %664 = vst.msk [vmem:[%s238] sm:$0xff] %vm663, %v617
      %666 = vrot.lane.b32.xlu0 %v617, 126
      %v667 = vpop.permute.xlu0 %666
      %vm669 = vcmask 261248
      %670 = vst.msk [vmem:[%s238] sm:$0xff] %vm669, %v667
      %671 = vrot.lane.b32.xlu0 %v617, 124
      %v672 = vpop.permute.xlu0 %671
      %vm674 = vcmask 392448
      %675 = vst.msk [vmem:[%s238] sm:$0xff] %vm674, %v672
      %676 = vrot.lane.b32.xlu0 %v617, 122
      %v677 = vpop.permute.xlu0 %676
      %vm679 = vcmask 523648
      %680 = vst.msk [vmem:[%s238] sm:$0xff] %vm679, %v677
      %681 = vrot.lane.b32.xlu0 %v617, 120
      %v682 = vpop.permute.xlu0 %681
      %vm684 = vcmask 654848
      %685 = vst.msk [vmem:[%s238] sm:$0xff] %vm684, %v682
      %686 = vrot.lane.b32.xlu0 %v617, 118
      %v687 = vpop.permute.xlu0 %686
      %vm689 = vcmask 786048
      %690 = vst.msk [vmem:[%s238] sm:$0xff] %vm689, %v687
      %691 = vrot.lane.b32.xlu0 %v617, 116
      %v692 = vpop.permute.xlu0 %691
      %vm694 = vcmask 917248
      %695 = vst.msk [vmem:[%s238] sm:$0xff] %vm694, %v692
      %697 = vrot.lane.b32.xlu0 %v617, 114
      %v698 = vpop.permute.xlu0 %697
      %699 = vrot.lane.b32.xlu0 %v619, 114
      %v700 = vpop.permute.xlu0 %699
      %vm701 = vcmask 932864
      %v702 = vsel %vm701, %v698, %v700
      %vm704 = vcmask 1048448
      %705 = vst.msk [vmem:[%s238] sm:$0xff] %vm704, %v702
      %706 = vrot.lane.b32.xlu0 %v619, 112
      %v707 = vpop.permute.xlu0 %706
      %709 = vst.msk [vmem:[%s238 + $0x8] sm:$0xff] %vm663, %v707
      %710 = vrot.lane.b32.xlu0 %v619, 110
      %v711 = vpop.permute.xlu0 %710
      %713 = vst.msk [vmem:[%s238 + $0x8] sm:$0xff] %vm669, %v711
      %714 = vrot.lane.b32.xlu0 %v619, 108
      %v715 = vpop.permute.xlu0 %714
      %717 = vst.msk [vmem:[%s238 + $0x8] sm:$0xff] %vm674, %v715
      %718 = vrot.lane.b32.xlu0 %v619, 106
      %v719 = vpop.permute.xlu0 %718
      %721 = vst.msk [vmem:[%s238 + $0x8] sm:$0xff] %vm679, %v719
      %722 = vrot.lane.b32.xlu0 %v619, 104
      %v723 = vpop.permute.xlu0 %722
      %725 = vst.msk [vmem:[%s238 + $0x8] sm:$0xff] %vm684, %v723
      %726 = vrot.lane.b32.xlu0 %v619, 102
      %v727 = vpop.permute.xlu0 %726
      %729 = vst.msk [vmem:[%s238 + $0x8] sm:$0xff] %vm689, %v727
      %731 = vrot.lane.b32.xlu0 %v619, 100
      %v732 = vpop.permute.xlu0 %731
      %733 = vrot.lane.b32.xlu0 %v658, 100
      %v734 = vpop.permute.xlu0 %733
      %vm735 = vcmask 818176
      %v736 = vsel %vm735, %v732, %v734
      %738 = vst.msk [vmem:[%s238 + $0x8] sm:$0xff] %vm694, %v736
      %739 = vrot.lane.b32.xlu0 %v658, 98
      %v740 = vpop.permute.xlu0 %739
      %742 = vst.msk [vmem:[%s238 + $0x8] sm:$0xff] %vm704, %v740
      %v743 = vld [vmem:[%s238] sm:$0xff]
      %v744 = vld [vmem:[%s238 + $0x8] sm:$0xff]
      %v745 = vadd.f32 %v743, %v744
      %746 = vadd.xlane.f32.xlu0 %v745
      %v747 = vpop.xlane.xlu0 %746
      %vm748 = vcmask 7168
      %749 = vst.msk [vmem:[%s244] sm:$0xff] %vm748, %v747
      %v750 = vmul.f32 %v743, %v743
      %v751 = vmul.f32 %v744, %v744
      %v752 = vadd.f32 %v750, %v751
      %753 = vadd.xlane.f32.xlu0 %v752
      %v754 = vpop.xlane.xlu0 %753
      %755 = vst.msk [vmem:[%s250] sm:$0xff] %vm748, %v754
      %s756 = smul.u32 2, %s21
      %p757 = scmp.lt.s32.totalorder %s20, 1
      %s758 = scalar_select %p757, %s20, 1
      %p759 = scmp.lt.s32.totalorder %s756, 1
      %s760 = scalar_select %p759, %s756, 1
      %s761 = smul.addr %s758, 2
      %s762 = sadd.s32 %s760, %s761
      %s763 = smul.addr %s762, 8
      %s764 = scalar_lea.vmem %s2, %s763
      %s765 = sadd.s32 %s20, %s21
      %p766 = scmp.lt.s32.totalorder %s765, 1
      %s767 = scalar_select %p766, %s765, 1
      %s768 = smul.addr %s767, 8
      %s769 = scalar_lea.vmem %s3, %s768
      %s770 = sadd.s32 %s20, %s21
      %p771 = scmp.lt.s32.totalorder %s770, 1
      %s772 = scalar_select %p771, %s770, 1
      %s773 = smul.addr %s772, 8
      %s774 = scalar_lea.vmem %s4, %s773
      // Predicated region
      $region29: #{basic_conv2d.2} parent=27 // pred_check
        %p775 = pneg %p95
      $region30: #{basic_conv2d.2} parent=27 // pred_check_branch
        %777 = sbr.rel (%p775) target = $region32
      $region31: #{basic_conv2d.2} parent=27 // pred_region
        %s778 = smul.u32 2, %s21
      $region32: #{basic_conv2d.2} parent=27 // pred_fallthru
        _
      // Predicated region
      $region33: #{basic_conv2d.2} parent=27 // pred_check
        %p779 = pneg %p123
      $region34: #{basic_conv2d.2} parent=27 // pred_check_branch
        %781 = sbr.rel (%p779) target = $region36
      $region35: #{basic_conv2d.2} parent=27 // pred_region
        %s782 = sadd.s32 %s20, %s21
      $region36: #{basic_conv2d.2} parent=27 // pred_fallthru
        _
      // Predicated region
      $region37: #{basic_conv2d.2} parent=27 // pred_check
        %p783 = pneg %p151
      $region38: #{basic_conv2d.2} parent=27 // pred_check_branch
        %785 = sbr.rel (%p783) target = $region40
      $region39: #{basic_conv2d.2} parent=27 // pred_region
        %s786 = sadd.s32 %s20, %s21
      $region40: #{basic_conv2d.2} parent=27 // pred_fallthru
        _
    $region28: #{basic_conv2d.2} parent=5 // pred_fallthru
      _
    %p787 = scmp.le.s32.totalorder 2, %s11
    // Predicated region
    $region41: #{basic_conv2d.2} parent=5 // pred_check
      %p788 = pneg %p787
    $region42: #{basic_conv2d.2} parent=5 // pred_check_branch
      %790 = sbr.rel (%p788) target = $region44
    $region43: #{basic_conv2d.2} parent=5 // pred_region
      %s791 = ssub.s32 %s11, 2
      // Predicated region
      $region45: #{basic_conv2d.2} parent=43 // pred_check
        %p792 = pneg %p101
      $region46: #{basic_conv2d.2} parent=43 // pred_check_branch
        %794 = sbr.rel (%p792) target = $region48
      $region47: #{basic_conv2d.2} parent=43 // pred_region
        %s795 = smul.u32 2, %s23
        %p796 = scmp.lt.s32.totalorder %s22, 1
        %s797 = scalar_select %p796, %s22, 1
        %p798 = scmp.lt.s32.totalorder %s795, 1
        %s799 = scalar_select %p798, %s795, 1
        %s800 = smul.addr %s797, 2
        %s801 = sadd.s32 %s799, %s800
        %s802 = smul.addr %s801, 8
        %s803 = scalar_lea.vmem %s2, %s802
      $region48: #{basic_conv2d.2} parent=43 // pred_fallthru
        _
      // Predicated region
      $region49: #{basic_conv2d.2} parent=43 // pred_check
        %p804 = pneg %p129
      $region50: #{basic_conv2d.2} parent=43 // pred_check_branch
        %806 = sbr.rel (%p804) target = $region52
      $region51: #{basic_conv2d.2} parent=43 // pred_region
        %s807 = sadd.s32 %s22, %s23
        %p808 = scmp.lt.s32.totalorder %s807, 1
        %s809 = scalar_select %p808, %s807, 1
        %s810 = smul.addr %s809, 8
        %s811 = scalar_lea.vmem %s3, %s810
      $region52: #{basic_conv2d.2} parent=43 // pred_fallthru
        _
      // Predicated region
      $region53: #{basic_conv2d.2} parent=43 // pred_check
        %p812 = pneg %p157
      $region54: #{basic_conv2d.2} parent=43 // pred_check_branch
        %814 = sbr.rel (%p812) target = $region56
      $region55: #{basic_conv2d.2} parent=43 // pred_region
        %s815 = sadd.s32 %s22, %s23
        %p816 = scmp.lt.s32.totalorder %s815, 1
        %s817 = scalar_select %p816, %s815, 1
        %s818 = smul.addr %s817, 8
        %s819 = scalar_lea.vmem %s4, %s818
      $region56: #{basic_conv2d.2} parent=43 // pred_fallthru
        _
    $region44: #{basic_conv2d.2} parent=5 // pred_fallthru
      _
  $region6: #{basic_conv2d.2} parent=0 // loop_footer
    %s15 = sadd.s32 1, %s11
  $region7: #{basic_conv2d.2} parent=0 // loop_footer_branch
    %10 = sbr.rel target = $region3
  $region8: #{basic_conv2d.2} parent=0 // loop_exit
    _

</llo_original>
